<compile_context>
chip_gen: v5e
topology: v5e:2x2
jax: 0.10.0
libtpu: 0.0.40
codegen_flags: <defaults>
</compile_context>

<pallas_src>
import functools
import warnings

import jax
import jax.numpy as jnp
from jax.experimental import pallas as pl
from jax.experimental.pallas import tpu as pltpu


# ---------------------------------------------------------------------------
# kernels
# ---------------------------------------------------------------------------

def _dwt_fused_kernel(x_ref, o_ref, *, w, fold):
    """Fully fused path (~2N HBM traffic).

    x_ref: (1, ct, th, fold*2*w) -- per folded row, lanes hold `fold` segments of
           [input row 2i (w lanes, cols interleaved) | input row 2i+1 (w lanes)].
    o_ref: (1, 4, ct, th, fold*wo) -- sub-bands [ll, lh, hl, hh], `fold` output
           rows folded into the lane axis.
    """
    wo = w // 2
    dt = o_ref.dtype
    for p in range(fold):                                  # static, small
        base = p * 2 * w
        # contiguous ref loads (static offsets): row-parity split is load-side,
        # no full-block relayout even when w is not a multiple of 128.
        r0 = x_ref[0, :, :, pl.ds(base, w)].astype(jnp.float32)       # row 2i
        r1 = x_ref[0, :, :, pl.ds(base + w, w)].astype(jnp.float32)   # row 2i+1
        sr = r0 + r1                       # lanes: [a+c, b+d, a+c, ...]
        dr = r1 - r0                       # lanes: [c-a, d-b, c-a, ...]
        se = sr[:, :, 0::2]                # a + c  (stride-2 lane deinterleave)
        so = sr[:, :, 1::2]                # b + d
        de = dr[:, :, 0::2]                # c - a
        do = dr[:, :, 1::2]                # d - b
        out_sl = pl.ds(p * wo, wo)
        o_ref[0, 0, :, :, out_sl] = (0.5 * (se + so)).astype(dt)   # ll
        o_ref[0, 1, :, :, out_sl] = (0.5 * (de + do)).astype(dt)   # lh
        o_ref[0, 2, :, :, out_sl] = (0.5 * (so - se)).astype(dt)   # hl
        o_ref[0, 3, :, :, out_sl] = (0.5 * (do - de)).astype(dt)   # hh


def _dwt_parity_kernel(xe_ref, xo_ref, o_ref, *, wo, fold):
    """Fallback path: column parity pre-split by XLA, only contiguous slices
    in-kernel (guaranteed lowering).

    xe_ref/xo_ref: (1, ct, th, fold*2*wo) -- even / odd input columns, lanes per
                   folded row = `fold` segments of [row 2i (wo) | row 2i+1 (wo)].
    o_ref:         (1, 4, ct, th, fold*wo) -- sub-bands [ll, lh, hl, hh].
    """
    dt = o_ref.dtype
    for p in range(fold):
        base = p * 2 * wo
        a = xe_ref[0, :, :, pl.ds(base, wo)].astype(jnp.float32)        # row 2i,   even cols
        c = xe_ref[0, :, :, pl.ds(base + wo, wo)].astype(jnp.float32)   # row 2i+1, even cols
        b = xo_ref[0, :, :, pl.ds(base, wo)].astype(jnp.float32)        # row 2i,   odd cols
        d = xo_ref[0, :, :, pl.ds(base + wo, wo)].astype(jnp.float32)   # row 2i+1, odd cols
        u = a + b                                     # butterfly: 12 VPU ops/pt
        v = c + d
        s = b - a
        t = d - c
        out_sl = pl.ds(p * wo, wo)
        o_ref[0, 0, :, :, out_sl] = (0.5 * (u + v)).astype(dt)   # ll
        o_ref[0, 1, :, :, out_sl] = (0.5 * (v - u)).astype(dt)   # lh
        o_ref[0, 2, :, :, out_sl] = (0.5 * (s + t)).astype(dt)   # hl
        o_ref[0, 3, :, :, out_sl] = (0.5 * (t - s)).astype(dt)   # hh


# ---------------------------------------------------------------------------
# pure-JAX reference (probe + self-test)
# ---------------------------------------------------------------------------

def _dwt_reference(x: jax.Array) -> jax.Array:
    B, C, H, W = x.shape
    Ho, Wo = H // 2, W // 2
    x6 = x.reshape(B, C, Ho, 2, Wo, 2).astype(jnp.float32)
    a = x6[:, :, :, 0, :, 0]
    b = x6[:, :, :, 0, :, 1]
    c = x6[:, :, :, 1, :, 0]
    d = x6[:, :, :, 1, :, 1]
    ll = 0.5 * (a + b + c + d)
    lh = 0.5 * (-a - b + c + d)
    hl = 0.5 * (-a + b - c + d)
    hh = 0.5 * (a - b - c + d)
    return jnp.concatenate([ll, lh, hl, hh], axis=1).astype(x.dtype)


# ---------------------------------------------------------------------------
# hardware-aware sizing heuristics
# ---------------------------------------------------------------------------

def _hw_vmem_bytes():
    try:
        info = pltpu.get_tpu_info()
        v = getattr(info, "vmem_capacity_bytes", None)
        if v:
            return int(v)
    except Exception:
        pass
    return 128 * 1024 * 1024      # conservative v5e/v6e default


def _target_block_bytes(hw_vmem):
    # Real footprint is ~6x the block (double-buffered in + out + f32 temps).
    # v5e/v6e (128 MiB VMEM): ~6 MiB blocks; v7x (64 MiB per TC): ~3 MiB.
    return (6 << 20) if hw_vmem >= (96 << 20) else (3 << 20)


def _vmem_limit_bytes(block_bytes, itemsize, hw_vmem):
    """Computed from the actual block footprint: 2x in + 2x out (double
    buffered) + in-flight f32 temporaries + slack; clamped to the chip."""
    f32_tmps = 2 * block_bytes * 4 // max(1, itemsize)
    need = 2 * block_bytes + 2 * block_bytes + f32_tmps + (4 << 20)
    return int(min(max(need, 16 << 20), int(hw_vmem * 0.8)))


def _divisors(n):
    return [d for d in range(1, n + 1) if n % d == 0]


def _choose_fold(Ho, Wo):
    """Fold k output rows into the lane axis so output blocks are lane-dense
    (last dim >= 128) -- the biggest lever for small feature maps."""
    if Wo >= 128:
        return 1
    good = [d for d in _divisors(Ho) if d * Wo >= 128]
    return min(good) if good else Ho


def _choose_tiles(B, C, Hf, lane_in_elems, itemsize, target_bytes):
    """Pick (channel_tile, row_tile) over the folded (B, C, Hf, lane) view so a
    block is ~target_bytes, the second-minor block dim is a multiple of 8 (or
    the full dim), and the grid is megacore-friendly."""
    row_bytes = lane_in_elems * itemsize
    max_rows = max(1, target_bytes // row_bytes)

    if Hf % 8 == 0:
        th_cands = [d for d in _divisors(Hf) if d % 8 == 0]
    else:
        th_cands = [Hf]                      # full-dim block keeps the spec legal
    fit = [d for d in th_cands if d <= max_rows]
    th = max(fit) if fit else min(th_cands)

    c_cands = _divisors(C)
    max_c = max(1, max_rows // th)
    fit_c = [d for d in c_cands if d <= max_c]
    ct = max(fit_c) if fit_c else 1

    def steps(ct_, th_):
        return B * (C // ct_) * (Hf // th_)

    def block_bytes(ct_, th_):
        return ct_ * th_ * row_bytes

    # Megacore (v7x): keep the step count even (a 1-step grid halves bandwidth,
    # an odd small grid idles one TC part of the time) and push towards >= 8
    # steps while blocks stay comfortably sized.  v5e/v6e are insensitive.
    min_split = 512 * 1024
    for _ in range(32):
        s = steps(ct, th)
        need_split = (s % 2 == 1 and s < 12) or \
                     (s < 8 and block_bytes(ct, th) >= 2 * min_split)
        if not need_split:
            break
        smaller_th = [d for d in th_cands if d < th]
        smaller_ct = [d for d in c_cands if d < ct]
        if smaller_th and block_bytes(ct, max(smaller_th)) >= min_split:
            th = max(smaller_th)
        elif smaller_ct and block_bytes(max(smaller_ct), th) >= min_split:
            ct = max(smaller_ct)
        elif smaller_th:
            th = max(smaller_th)
        elif smaller_ct:
            ct = max(smaller_ct)
        else:
            break
    return ct, th


# ---------------------------------------------------------------------------
# pallas_call builders
# ---------------------------------------------------------------------------

def _compiler_params(n_axes, vmem_limit):
    return pltpu.CompilerParams(
        dimension_semantics=("parallel",) * n_axes,
        vmem_limit_bytes=vmem_limit,
    )


def _fused_call(B, C, Hf, W, fold, ct, th, dtype, vmem_limit):
    Wo = W // 2
    Lin, Lo = fold * 2 * W, fold * Wo
    grid = (B, C // ct, Hf // th)
    kernel = functools.partial(_dwt_fused_kernel, w=W, fold=fold)
    return pl.pallas_call(
        kernel,
        out_shape=jax.ShapeDtypeStruct((B, 4, C, Hf, Lo), dtype),
        grid_spec=pltpu.PrefetchScalarGridSpec(
            num_scalar_prefetch=0,
            grid=grid,
            in_specs=[pl.BlockSpec((1, ct, th, Lin), lambda b, c, h: (b, c, h, 0))],
            out_specs=pl.BlockSpec((1, 4, ct, th, Lo), lambda b, c, h: (b, 0, c, h, 0)),
        ),
        compiler_params=_compiler_params(len(grid), vmem_limit),
    )


def _parity_call(B, C, Hf, Wo, fold, ct, th, dtype, vmem_limit):
    Lp, Lo = fold * 2 * Wo, fold * Wo
    grid = (B, C // ct, Hf // th)
    kernel = functools.partial(_dwt_parity_kernel, wo=Wo, fold=fold)
    in_spec = pl.BlockSpec((1, ct, th, Lp), lambda b, c, h: (b, c, h, 0))
    return pl.pallas_call(
        kernel,
        out_shape=jax.ShapeDtypeStruct((B, 4, C, Hf, Lo), dtype),
        grid_spec=pltpu.PrefetchScalarGridSpec(
            num_scalar_prefetch=0,
            grid=grid,
            in_specs=[in_spec, in_spec],
            out_specs=pl.BlockSpec((1, 4, ct, th, Lo), lambda b, c, h: (b, 0, c, h, 0)),
        ),
        compiler_params=_compiler_params(len(grid), vmem_limit),
    )


# ---------------------------------------------------------------------------
# fused-path probe (cheap: one block, same W / fold / block shapes)
# ---------------------------------------------------------------------------

def _probe_fused(W, Wo, fold, ct, th, dtype, vmem_limit):
    try:
        Hp = 2 * fold * th                           # one block worth of rows
        n = ct * Hp * W
        img = ((jnp.arange(n, dtype=jnp.float32) % 13.0) - 6.0)
        img = img.reshape(1, ct, Hp, W).astype(dtype)
        call = _fused_call(1, ct, th, W, fold, ct, th, dtype, vmem_limit)
        got = call(img.reshape(1, ct, th, fold * 2 * W))
        got = got.reshape(1, 4 * ct, fold * th, Wo).astype(jnp.float32)
        want = _dwt_reference(img).astype(jnp.float32)
        ok = bool(jnp.allclose(got, want, atol=1e-1, rtol=2e-2))
        if not ok:
            warnings.warn(
                "DWT fused Pallas kernel produced wrong values on its probe; "
                "using the (correct, ~2x slower) parity-split kernel instead.",
                RuntimeWarning)
        return ok
    except Exception as e:      # lowering/compile failure on this jax/Mosaic
        warnings.warn(
            "DWT fused Pallas kernel unavailable "
            f"({type(e).__name__}); using the (correct, ~2x slower) "
            "parity-split kernel instead.", RuntimeWarning)
        return False


# ---------------------------------------------------------------------------
# per-shape builder
# ---------------------------------------------------------------------------

@functools.lru_cache(maxsize=None)
def _make_dwt(B, C, H, W, dtype_name):
    """Return a jitted fn x(B,C,H,W) -> (B,4C,Ho,Wo), preferring the fused kernel."""
    dtype = jnp.dtype(dtype_name)
    itemsize = dtype.itemsize
    Ho, Wo = H // 2, W // 2

    fold = _choose_fold(Ho, Wo)
    Hf = Ho // fold
    Lin = fold * 2 * W                              # input lanes per folded row

    hw_vmem = _hw_vmem_bytes()
    target = _target_block_bytes(hw_vmem)
    ct, th = _choose_tiles(B, C, Hf, Lin, itemsize, target)

    block_bytes = ct * th * Lin * itemsize          # out block has the same bytes
    vmem_limit = _vmem_limit_bytes(block_bytes, itemsize, hw_vmem)

    fused = _fused_call(B, C, Hf, W, fold, ct, th, dtype, vmem_limit)

    def fused_fn(x):
        # (B,C,H,W) -> (B,C,Hf,fold*2W) is a free contiguous view (row pairs
        # and `fold` output rows merged into lanes); no HBM pass before the kernel.
        out5 = fused(x.reshape(B, C, Hf, Lin))
        return out5.reshape(B, 4 * C, Ho, Wo)       # contiguous -> free

    parity = _parity_call(B, C, Hf, Wo, fold, ct, th, dtype, vmem_limit)
    Lp = fold * 2 * Wo

    def parity_fn(x):
        # XLA does the column-parity split (two stride-2 slices, one fused
        # pass); everything else stays in the lane-dense Pallas kernel.
        xe = x[..., 0::2].reshape(B, C, Hf, Lp)
        xo = x[..., 1::2].reshape(B, C, Hf, Lp)
        out5 = parity(xe, xo)
        return out5.reshape(B, 4 * C, Ho, Wo)

    if _probe_fused(W, Wo, fold, ct, th, dtype, vmem_limit):
        return jax.jit(fused_fn)
    return jax.jit(parity_fn)


# ---------------------------------------------------------------------------
# public entry point
# ---------------------------------------------------------------------------

def dwt_pallas(x: jax.Array) -> jax.Array:
    """x: (B, C, H, W) -> (B, 4*C, H//2, W//2) Haar DWT (net.py channel order)."""
    B, C, H, W = x.shape
    assert H % 2 == 0 and W % 2 == 0, "DWT needs even spatial dims"
    fn = _make_dwt(B, C, H, W, str(x.dtype))
    return fn(x)


if __name__ == "__main__":
    key = jax.random.PRNGKey(0)
    B, C, H, W = 2, 4, 16, 16
    x = jax.random.normal(key, (B, C, H, W), dtype=jnp.float32)

    out = dwt_pallas(x)
    out = jax.block_until_ready(out)

    ref = _dwt_reference(x)
    assert out.shape == (B, 4 * C, H // 2, W // 2), out.shape
    assert bool(jnp.allclose(out, ref, atol=1e-5, rtol=1e-5)), float(
        jnp.max(jnp.abs(out - ref)))

    print("KERNEL_OK")
</pallas_src>

<mosaic_0001>
module attributes {stable_mosaic.version = 11 : i64} {
  func.func @_dwt_parity_kernel(%arg0: i32, %arg1: i32, %arg2: i32, %arg3: memref<1x4x1x128xf32, #tpu.memory_space<vmem>>, %arg4: memref<1x4x1x128xf32, #tpu.memory_space<vmem>>, %arg5: memref<1x4x4x1x64xf32, #tpu.memory_space<vmem>>) attributes {dimension_semantics = [#tpu.dimension_semantics<parallel>, #tpu.dimension_semantics<parallel>, #tpu.dimension_semantics<parallel>], iteration_bounds = array<i64: 2, 1, 1>, scalar_prefetch = 0 : i64, scratch_operands = 0 : i64, tpu.core_type = #tpu.core_type<tc>, window_params = [{transform_indices = @transform_0, window_bounds = array<i64: 1, 4, 1, 128>}, {transform_indices = @transform_1, window_bounds = array<i64: 1, 4, 1, 128>}, {transform_indices = @transform_2, window_bounds = array<i64: 1, 4, 4, 1, 64>}]} {
    %c0 = arith.constant 0 : index
    %c0_0 = arith.constant 0 : index
    %c0_1 = arith.constant 0 : index
    %c0_2 = arith.constant 0 : index
    %0 = vector.load %arg3[%c0, %c0_0, %c0_1, %c0_2] : memref<1x4x1x128xf32, #tpu.memory_space<vmem>>, vector<1x4x1x8xf32>
    %1 = vector.shape_cast %0 : vector<1x4x1x8xf32> to vector<4x1x8xf32>
    %c0_3 = arith.constant 0 : index
    %c0_4 = arith.constant 0 : index
    %c0_5 = arith.constant 0 : index
    %c8 = arith.constant 8 : index
    %2 = vector.load %arg3[%c0_3, %c0_4, %c0_5, %c8] : memref<1x4x1x128xf32, #tpu.memory_space<vmem>>, vector<1x4x1x8xf32>
    %3 = vector.shape_cast %2 : vector<1x4x1x8xf32> to vector<4x1x8xf32>
    %c0_6 = arith.constant 0 : index
    %c0_7 = arith.constant 0 : index
    %c0_8 = arith.constant 0 : index
    %c0_9 = arith.constant 0 : index
    %4 = vector.load %arg4[%c0_6, %c0_7, %c0_8, %c0_9] : memref<1x4x1x128xf32, #tpu.memory_space<vmem>>, vector<1x4x1x8xf32>
    %5 = vector.shape_cast %4 : vector<1x4x1x8xf32> to vector<4x1x8xf32>
    %c0_10 = arith.constant 0 : index
    %c0_11 = arith.constant 0 : index
    %c0_12 = arith.constant 0 : index
    %c8_13 = arith.constant 8 : index
    %6 = vector.load %arg4[%c0_10, %c0_11, %c0_12, %c8_13] : memref<1x4x1x128xf32, #tpu.memory_space<vmem>>, vector<1x4x1x8xf32>
    %7 = vector.shape_cast %6 : vector<1x4x1x8xf32> to vector<4x1x8xf32>
    %8 = arith.addf %1, %5 : vector<4x1x8xf32>
    %9 = arith.addf %3, %7 : vector<4x1x8xf32>
    %10 = arith.subf %5, %1 : vector<4x1x8xf32>
    %11 = arith.subf %7, %3 : vector<4x1x8xf32>
    %12 = arith.addf %8, %9 : vector<4x1x8xf32>
    %cst = arith.constant 5.000000e-01 : f32
    %13 = vector.broadcast %cst : f32 to vector<4x1x8xf32>
    %14 = arith.mulf %13, %12 : vector<4x1x8xf32>
    %c0_14 = arith.constant 0 : index
    %c0_15 = arith.constant 0 : index
    %c0_16 = arith.constant 0 : index
    %c0_17 = arith.constant 0 : index
    %c0_18 = arith.constant 0 : index
    %15 = vector.load %arg5[%c0_14, %c0_15, %c0_16, %c0_17, %c0_18] : memref<1x4x4x1x64xf32, #tpu.memory_space<vmem>>, vector<1x1x4x1x8xf32>
    %16 = vector.shape_cast %15 : vector<1x1x4x1x8xf32> to vector<4x1x8xf32>
    %17 = vector.shape_cast %14 : vector<4x1x8xf32> to vector<1x1x4x1x8xf32>
    tpu.vector_store %arg5[%c0_14, %c0_15, %c0_16, %c0_17, %c0_18], %17 {strides = array<i32>} : memref<1x4x4x1x64xf32, #tpu.memory_space<vmem>>, vector<1x1x4x1x8xf32>,
    %18 = arith.subf %9, %8 : vector<4x1x8xf32>
    %cst_19 = arith.constant 5.000000e-01 : f32
    %19 = vector.broadcast %cst_19 : f32 to vector<4x1x8xf32>
    %20 = arith.mulf %19, %18 : vector<4x1x8xf32>
    %c0_20 = arith.constant 0 : index
    %c1 = arith.constant 1 : index
    %c0_21 = arith.constant 0 : index
    %c0_22 = arith.constant 0 : index
    %c0_23 = arith.constant 0 : index
    %21 = vector.load %arg5[%c0_20, %c1, %c0_21, %c0_22, %c0_23] : memref<1x4x4x1x64xf32, #tpu.memory_space<vmem>>, vector<1x1x4x1x8xf32>
    %22 = vector.shape_cast %21 : vector<1x1x4x1x8xf32> to vector<4x1x8xf32>
    %23 = vector.shape_cast %20 : vector<4x1x8xf32> to vector<1x1x4x1x8xf32>
    tpu.vector_store %arg5[%c0_20, %c1, %c0_21, %c0_22, %c0_23], %23 {strides = array<i32>} : memref<1x4x4x1x64xf32, #tpu.memory_space<vmem>>, vector<1x1x4x1x8xf32>,
    %24 = arith.addf %10, %11 : vector<4x1x8xf32>
    %cst_24 = arith.constant 5.000000e-01 : f32
    %25 = vector.broadcast %cst_24 : f32 to vector<4x1x8xf32>
    %26 = arith.mulf %25, %24 : vector<4x1x8xf32>
    %c0_25 = arith.constant 0 : index
    %c2 = arith.constant 2 : index
    %c0_26 = arith.constant 0 : index
    %c0_27 = arith.constant 0 : index
    %c0_28 = arith.constant 0 : index
    %27 = vector.load %arg5[%c0_25, %c2, %c0_26, %c0_27, %c0_28] : memref<1x4x4x1x64xf32, #tpu.memory_space<vmem>>, vector<1x1x4x1x8xf32>
    %28 = vector.shape_cast %27 : vector<1x1x4x1x8xf32> to vector<4x1x8xf32>
    %29 = vector.shape_cast %26 : vector<4x1x8xf32> to vector<1x1x4x1x8xf32>
    tpu.vector_store %arg5[%c0_25, %c2, %c0_26, %c0_27, %c0_28], %29 {strides = array<i32>} : memref<1x4x4x1x64xf32, #tpu.memory_space<vmem>>, vector<1x1x4x1x8xf32>,
    %30 = arith.subf %11, %10 : vector<4x1x8xf32>
    %cst_29 = arith.constant 5.000000e-01 : f32
    %31 = vector.broadcast %cst_29 : f32 to vector<4x1x8xf32>
    %32 = arith.mulf %31, %30 : vector<4x1x8xf32>
    %c0_30 = arith.constant 0 : index
    %c3 = arith.constant 3 : index
    %c0_31 = arith.constant 0 : index
    %c0_32 = arith.constant 0 : index
    %c0_33 = arith.constant 0 : index
    %33 = vector.load %arg5[%c0_30, %c3, %c0_31, %c0_32, %c0_33] : memref<1x4x4x1x64xf32, #tpu.memory_space<vmem>>, vector<1x1x4x1x8xf32>
    %34 = vector.shape_cast %33 : vector<1x1x4x1x8xf32> to vector<4x1x8xf32>
    %35 = vector.shape_cast %32 : vector<4x1x8xf32> to vector<1x1x4x1x8xf32>
    tpu.vector_store %arg5[%c0_30, %c3, %c0_31, %c0_32, %c0_33], %35 {strides = array<i32>} : memref<1x4x4x1x64xf32, #tpu.memory_space<vmem>>, vector<1x1x4x1x8xf32>,
    %c0_34 = arith.constant 0 : index
    %c0_35 = arith.constant 0 : index
    %c0_36 = arith.constant 0 : index
    %c16 = arith.constant 16 : index
    %36 = vector.load %arg3[%c0_34, %c0_35, %c0_36, %c16] : memref<1x4x1x128xf32, #tpu.memory_space<vmem>>, vector<1x4x1x8xf32>
    %37 = vector.shape_cast %36 : vector<1x4x1x8xf32> to vector<4x1x8xf32>
    %c0_37 = arith.constant 0 : index
    %c0_38 = arith.constant 0 : index
    %c0_39 = arith.constant 0 : index
    %c24 = arith.constant 24 : index
    %38 = vector.load %arg3[%c0_37, %c0_38, %c0_39, %c24] : memref<1x4x1x128xf32, #tpu.memory_space<vmem>>, vector<1x4x1x8xf32>
    %39 = vector.shape_cast %38 : vector<1x4x1x8xf32> to vector<4x1x8xf32>
    %c0_40 = arith.constant 0 : index
    %c0_41 = arith.constant 0 : index
    %c0_42 = arith.constant 0 : index
    %c16_43 = arith.constant 16 : index
    %40 = vector.load %arg4[%c0_40, %c0_41, %c0_42, %c16_43] : memref<1x4x1x128xf32, #tpu.memory_space<vmem>>, vector<1x4x1x8xf32>
    %41 = vector.shape_cast %40 : vector<1x4x1x8xf32> to vector<4x1x8xf32>
    %c0_44 = arith.constant 0 : index
    %c0_45 = arith.constant 0 : index
    %c0_46 = arith.constant 0 : index
    %c24_47 = arith.constant 24 : index
    %42 = vector.load %arg4[%c0_44, %c0_45, %c0_46, %c24_47] : memref<1x4x1x128xf32, #tpu.memory_space<vmem>>, vector<1x4x1x8xf32>
    %43 = vector.shape_cast %42 : vector<1x4x1x8xf32> to vector<4x1x8xf32>
    %44 = arith.addf %37, %41 : vector<4x1x8xf32>
    %45 = arith.addf %39, %43 : vector<4x1x8xf32>
    %46 = arith.subf %41, %37 : vector<4x1x8xf32>
    %47 = arith.subf %43, %39 : vector<4x1x8xf32>
    %48 = arith.addf %44, %45 : vector<4x1x8xf32>
    %cst_48 = arith.constant 5.000000e-01 : f32
    %49 = vector.broadcast %cst_48 : f32 to vector<4x1x8xf32>
    %50 = arith.mulf %49, %48 : vector<4x1x8xf32>
    %c0_49 = arith.constant 0 : index
    %c0_50 = arith.constant 0 : index
    %c0_51 = arith.constant 0 : index
    %c0_52 = arith.constant 0 : index
    %c8_53 = arith.constant 8 : index
    %51 = vector.load %arg5[%c0_49, %c0_50, %c0_51, %c0_52, %c8_53] : memref<1x4x4x1x64xf32, #tpu.memory_space<vmem>>, vector<1x1x4x1x8xf32>
    %52 = vector.shape_cast %51 : vector<1x1x4x1x8xf32> to vector<4x1x8xf32>
    %53 = vector.shape_cast %50 : vector<4x1x8xf32> to vector<1x1x4x1x8xf32>
    tpu.vector_store %arg5[%c0_49, %c0_50, %c0_51, %c0_52, %c8_53], %53 {strides = array<i32>} : memref<1x4x4x1x64xf32, #tpu.memory_space<vmem>>, vector<1x1x4x1x8xf32>,
    %54 = arith.subf %45, %44 : vector<4x1x8xf32>
    %cst_54 = arith.constant 5.000000e-01 : f32
    %55 = vector.broadcast %cst_54 : f32 to vector<4x1x8xf32>
    %56 = arith.mulf %55, %54 : vector<4x1x8xf32>
    %c0_55 = arith.constant 0 : index
    %c1_56 = arith.constant 1 : index
    %c0_57 = arith.constant 0 : index
    %c0_58 = arith.constant 0 : index
    %c8_59 = arith.constant 8 : index
    %57 = vector.load %arg5[%c0_55, %c1_56, %c0_57, %c0_58, %c8_59] : memref<1x4x4x1x64xf32, #tpu.memory_space<vmem>>, vector<1x1x4x1x8xf32>
    %58 = vector.shape_cast %57 : vector<1x1x4x1x8xf32> to vector<4x1x8xf32>
    %59 = vector.shape_cast %56 : vector<4x1x8xf32> to vector<1x1x4x1x8xf32>
    tpu.vector_store %arg5[%c0_55, %c1_56, %c0_57, %c0_58, %c8_59], %59 {strides = array<i32>} : memref<1x4x4x1x64xf32, #tpu.memory_space<vmem>>, vector<1x1x4x1x8xf32>,
    %60 = arith.addf %46, %47 : vector<4x1x8xf32>
    %cst_60 = arith.constant 5.000000e-01 : f32
    %61 = vector.broadcast %cst_60 : f32 to vector<4x1x8xf32>
    %62 = arith.mulf %61, %60 : vector<4x1x8xf32>
    %c0_61 = arith.constant 0 : index
    %c2_62 = arith.constant 2 : index
    %c0_63 = arith.constant 0 : index
    %c0_64 = arith.constant 0 : index
    %c8_65 = arith.constant 8 : index
    %63 = vector.load %arg5[%c0_61, %c2_62, %c0_63, %c0_64, %c8_65] : memref<1x4x4x1x64xf32, #tpu.memory_space<vmem>>, vector<1x1x4x1x8xf32>
    %64 = vector.shape_cast %63 : vector<1x1x4x1x8xf32> to vector<4x1x8xf32>
    %65 = vector.shape_cast %62 : vector<4x1x8xf32> to vector<1x1x4x1x8xf32>
    tpu.vector_store %arg5[%c0_61, %c2_62, %c0_63, %c0_64, %c8_65], %65 {strides = array<i32>} : memref<1x4x4x1x64xf32, #tpu.memory_space<vmem>>, vector<1x1x4x1x8xf32>,
    %66 = arith.subf %47, %46 : vector<4x1x8xf32>
    %cst_66 = arith.constant 5.000000e-01 : f32
    %67 = vector.broadcast %cst_66 : f32 to vector<4x1x8xf32>
    %68 = arith.mulf %67, %66 : vector<4x1x8xf32>
    %c0_67 = arith.constant 0 : index
    %c3_68 = arith.constant 3 : index
    %c0_69 = arith.constant 0 : index
    %c0_70 = arith.constant 0 : index
    %c8_71 = arith.constant 8 : index
    %69 = vector.load %arg5[%c0_67, %c3_68, %c0_69, %c0_70, %c8_71] : memref<1x4x4x1x64xf32, #tpu.memory_space<vmem>>, vector<1x1x4x1x8xf32>
    %70 = vector.shape_cast %69 : vector<1x1x4x1x8xf32> to vector<4x1x8xf32>
    %71 = vector.shape_cast %68 : vector<4x1x8xf32> to vector<1x1x4x1x8xf32>
    tpu.vector_store %arg5[%c0_67, %c3_68, %c0_69, %c0_70, %c8_71], %71 {strides = array<i32>} : memref<1x4x4x1x64xf32, #tpu.memory_space<vmem>>, vector<1x1x4x1x8xf32>,
    %c0_72 = arith.constant 0 : index
    %c0_73 = arith.constant 0 : index
    %c0_74 = arith.constant 0 : index
    %c32 = arith.constant 32 : index
    %72 = vector.load %arg3[%c0_72, %c0_73, %c0_74, %c32] : memref<1x4x1x128xf32, #tpu.memory_space<vmem>>, vector<1x4x1x8xf32>
    %73 = vector.shape_cast %72 : vector<1x4x1x8xf32> to vector<4x1x8xf32>
    %c0_75 = arith.constant 0 : index
    %c0_76 = arith.constant 0 : index
    %c0_77 = arith.constant 0 : index
    %c40 = arith.constant 40 : index
    %74 = vector.load %arg3[%c0_75, %c0_76, %c0_77, %c40] : memref<1x4x1x128xf32, #tpu.memory_space<vmem>>, vector<1x4x1x8xf32>
    %75 = vector.shape_cast %74 : vector<1x4x1x8xf32> to vector<4x1x8xf32>
    %c0_78 = arith.constant 0 : index
    %c0_79 = arith.constant 0 : index
    %c0_80 = arith.constant 0 : index
    %c32_81 = arith.constant 32 : index
    %76 = vector.load %arg4[%c0_78, %c0_79, %c0_80, %c32_81] : memref<1x4x1x128xf32, #tpu.memory_space<vmem>>, vector<1x4x1x8xf32>
    %77 = vector.shape_cast %76 : vector<1x4x1x8xf32> to vector<4x1x8xf32>
    %c0_82 = arith.constant 0 : index
    %c0_83 = arith.constant 0 : index
    %c0_84 = arith.constant 0 : index
    %c40_85 = arith.constant 40 : index
    %78 = vector.load %arg4[%c0_82, %c0_83, %c0_84, %c40_85] : memref<1x4x1x128xf32, #tpu.memory_space<vmem>>, vector<1x4x1x8xf32>
    %79 = vector.shape_cast %78 : vector<1x4x1x8xf32> to vector<4x1x8xf32>
    %80 = arith.addf %73, %77 : vector<4x1x8xf32>
    %81 = arith.addf %75, %79 : vector<4x1x8xf32>
    %82 = arith.subf %77, %73 : vector<4x1x8xf32>
    %83 = arith.subf %79, %75 : vector<4x1x8xf32>
    %84 = arith.addf %80, %81 : vector<4x1x8xf32>
    %cst_86 = arith.constant 5.000000e-01 : f32
    %85 = vector.broadcast %cst_86 : f32 to vector<4x1x8xf32>
    %86 = arith.mulf %85, %84 : vector<4x1x8xf32>
    %c0_87 = arith.constant 0 : index
    %c0_88 = arith.constant 0 : index
    %c0_89 = arith.constant 0 : index
    %c0_90 = arith.constant 0 : index
    %c16_91 = arith.constant 16 : index
    %87 = vector.load %arg5[%c0_87, %c0_88, %c0_89, %c0_90, %c16_91] : memref<1x4x4x1x64xf32, #tpu.memory_space<vmem>>, vector<1x1x4x1x8xf32>
    %88 = vector.shape_cast %87 : vector<1x1x4x1x8xf32> to vector<4x1x8xf32>
    %89 = vector.shape_cast %86 : vector<4x1x8xf32> to vector<1x1x4x1x8xf32>
    tpu.vector_store %arg5[%c0_87, %c0_88, %c0_89, %c0_90, %c16_91], %89 {strides = array<i32>} : memref<1x4x4x1x64xf32, #tpu.memory_space<vmem>>, vector<1x1x4x1x8xf32>,
    %90 = arith.subf %81, %80 : vector<4x1x8xf32>
    %cst_92 = arith.constant 5.000000e-01 : f32
    %91 = vector.broadcast %cst_92 : f32 to vector<4x1x8xf32>
    %92 = arith.mulf %91, %90 : vector<4x1x8xf32>
    %c0_93 = arith.constant 0 : index
    %c1_94 = arith.constant 1 : index
    %c0_95 = arith.constant 0 : index
    %c0_96 = arith.constant 0 : index
    %c16_97 = arith.constant 16 : index
    %93 = vector.load %arg5[%c0_93, %c1_94, %c0_95, %c0_96, %c16_97] : memref<1x4x4x1x64xf32, #tpu.memory_space<vmem>>, vector<1x1x4x1x8xf32>
    %94 = vector.shape_cast %93 : vector<1x1x4x1x8xf32> to vector<4x1x8xf32>
    %95 = vector.shape_cast %92 : vector<4x1x8xf32> to vector<1x1x4x1x8xf32>
    tpu.vector_store %arg5[%c0_93, %c1_94, %c0_95, %c0_96, %c16_97], %95 {strides = array<i32>} : memref<1x4x4x1x64xf32, #tpu.memory_space<vmem>>, vector<1x1x4x1x8xf32>,
    %96 = arith.addf %82, %83 : vector<4x1x8xf32>
    %cst_98 = arith.constant 5.000000e-01 : f32
    %97 = vector.broadcast %cst_98 : f32 to vector<4x1x8xf32>
    %98 = arith.mulf %97, %96 : vector<4x1x8xf32>
    %c0_99 = arith.constant 0 : index
    %c2_100 = arith.constant 2 : index
    %c0_101 = arith.constant 0 : index
    %c0_102 = arith.constant 0 : index
    %c16_103 = arith.constant 16 : index
    %99 = vector.load %arg5[%c0_99, %c2_100, %c0_101, %c0_102, %c16_103] : memref<1x4x4x1x64xf32, #tpu.memory_space<vmem>>, vector<1x1x4x1x8xf32>
    %100 = vector.shape_cast %99 : vector<1x1x4x1x8xf32> to vector<4x1x8xf32>
    %101 = vector.shape_cast %98 : vector<4x1x8xf32> to vector<1x1x4x1x8xf32>
    tpu.vector_store %arg5[%c0_99, %c2_100, %c0_101, %c0_102, %c16_103], %101 {strides = array<i32>} : memref<1x4x4x1x64xf32, #tpu.memory_space<vmem>>, vector<1x1x4x1x8xf32>,
    %102 = arith.subf %83, %82 : vector<4x1x8xf32>
    %cst_104 = arith.constant 5.000000e-01 : f32
    %103 = vector.broadcast %cst_104 : f32 to vector<4x1x8xf32>
    %104 = arith.mulf %103, %102 : vector<4x1x8xf32>
    %c0_105 = arith.constant 0 : index
    %c3_106 = arith.constant 3 : index
    %c0_107 = arith.constant 0 : index
    %c0_108 = arith.constant 0 : index
    %c16_109 = arith.constant 16 : index
    %105 = vector.load %arg5[%c0_105, %c3_106, %c0_107, %c0_108, %c16_109] : memref<1x4x4x1x64xf32, #tpu.memory_space<vmem>>, vector<1x1x4x1x8xf32>
    %106 = vector.shape_cast %105 : vector<1x1x4x1x8xf32> to vector<4x1x8xf32>
    %107 = vector.shape_cast %104 : vector<4x1x8xf32> to vector<1x1x4x1x8xf32>
    tpu.vector_store %arg5[%c0_105, %c3_106, %c0_107, %c0_108, %c16_109], %107 {strides = array<i32>} : memref<1x4x4x1x64xf32, #tpu.memory_space<vmem>>, vector<1x1x4x1x8xf32>,
    %c0_110 = arith.constant 0 : index
    %c0_111 = arith.constant 0 : index
    %c0_112 = arith.constant 0 : index
    %c48 = arith.constant 48 : index
    %108 = vector.load %arg3[%c0_110, %c0_111, %c0_112, %c48] : memref<1x4x1x128xf32, #tpu.memory_space<vmem>>, vector<1x4x1x8xf32>
    %109 = vector.shape_cast %108 : vector<1x4x1x8xf32> to vector<4x1x8xf32>
    %c0_113 = arith.constant 0 : index
    %c0_114 = arith.constant 0 : index
    %c0_115 = arith.constant 0 : index
    %c56 = arith.constant 56 : index
    %110 = vector.load %arg3[%c0_113, %c0_114, %c0_115, %c56] : memref<1x4x1x128xf32, #tpu.memory_space<vmem>>, vector<1x4x1x8xf32>
    %111 = vector.shape_cast %110 : vector<1x4x1x8xf32> to vector<4x1x8xf32>
    %c0_116 = arith.constant 0 : index
    %c0_117 = arith.constant 0 : index
    %c0_118 = arith.constant 0 : index
    %c48_119 = arith.constant 48 : index
    %112 = vector.load %arg4[%c0_116, %c0_117, %c0_118, %c48_119] : memref<1x4x1x128xf32, #tpu.memory_space<vmem>>, vector<1x4x1x8xf32>
    %113 = vector.shape_cast %112 : vector<1x4x1x8xf32> to vector<4x1x8xf32>
    %c0_120 = arith.constant 0 : index
    %c0_121 = arith.constant 0 : index
    %c0_122 = arith.constant 0 : index
    %c56_123 = arith.constant 56 : index
    %114 = vector.load %arg4[%c0_120, %c0_121, %c0_122, %c56_123] : memref<1x4x1x128xf32, #tpu.memory_space<vmem>>, vector<1x4x1x8xf32>
    %115 = vector.shape_cast %114 : vector<1x4x1x8xf32> to vector<4x1x8xf32>
    %116 = arith.addf %109, %113 : vector<4x1x8xf32>
    %117 = arith.addf %111, %115 : vector<4x1x8xf32>
    %118 = arith.subf %113, %109 : vector<4x1x8xf32>
    %119 = arith.subf %115, %111 : vector<4x1x8xf32>
    %120 = arith.addf %116, %117 : vector<4x1x8xf32>
    %cst_124 = arith.constant 5.000000e-01 : f32
    %121 = vector.broadcast %cst_124 : f32 to vector<4x1x8xf32>
    %122 = arith.mulf %121, %120 : vector<4x1x8xf32>
    %c0_125 = arith.constant 0 : index
    %c0_126 = arith.constant 0 : index
    %c0_127 = arith.constant 0 : index
    %c0_128 = arith.constant 0 : index
    %c24_129 = arith.constant 24 : index
    %123 = vector.load %arg5[%c0_125, %c0_126, %c0_127, %c0_128, %c24_129] : memref<1x4x4x1x64xf32, #tpu.memory_space<vmem>>, vector<1x1x4x1x8xf32>
    %124 = vector.shape_cast %123 : vector<1x1x4x1x8xf32> to vector<4x1x8xf32>
    %125 = vector.shape_cast %122 : vector<4x1x8xf32> to vector<1x1x4x1x8xf32>
    tpu.vector_store %arg5[%c0_125, %c0_126, %c0_127, %c0_128, %c24_129], %125 {strides = array<i32>} : memref<1x4x4x1x64xf32, #tpu.memory_space<vmem>>, vector<1x1x4x1x8xf32>,
    %126 = arith.subf %117, %116 : vector<4x1x8xf32>
    %cst_130 = arith.constant 5.000000e-01 : f32
    %127 = vector.broadcast %cst_130 : f32 to vector<4x1x8xf32>
    %128 = arith.mulf %127, %126 : vector<4x1x8xf32>
    %c0_131 = arith.constant 0 : index
    %c1_132 = arith.constant 1 : index
    %c0_133 = arith.constant 0 : index
    %c0_134 = arith.constant 0 : index
    %c24_135 = arith.constant 24 : index
    %129 = vector.load %arg5[%c0_131, %c1_132, %c0_133, %c0_134, %c24_135] : memref<1x4x4x1x64xf32, #tpu.memory_space<vmem>>, vector<1x1x4x1x8xf32>
    %130 = vector.shape_cast %129 : vector<1x1x4x1x8xf32> to vector<4x1x8xf32>
    %131 = vector.shape_cast %128 : vector<4x1x8xf32> to vector<1x1x4x1x8xf32>
    tpu.vector_store %arg5[%c0_131, %c1_132, %c0_133, %c0_134, %c24_135], %131 {strides = array<i32>} : memref<1x4x4x1x64xf32, #tpu.memory_space<vmem>>, vector<1x1x4x1x8xf32>,
    %132 = arith.addf %118, %119 : vector<4x1x8xf32>
    %cst_136 = arith.constant 5.000000e-01 : f32
    %133 = vector.broadcast %cst_136 : f32 to vector<4x1x8xf32>
    %134 = arith.mulf %133, %132 : vector<4x1x8xf32>
    %c0_137 = arith.constant 0 : index
    %c2_138 = arith.constant 2 : index
    %c0_139 = arith.constant 0 : index
    %c0_140 = arith.constant 0 : index
    %c24_141 = arith.constant 24 : index
    %135 = vector.load %arg5[%c0_137, %c2_138, %c0_139, %c0_140, %c24_141] : memref<1x4x4x1x64xf32, #tpu.memory_space<vmem>>, vector<1x1x4x1x8xf32>
    %136 = vector.shape_cast %135 : vector<1x1x4x1x8xf32> to vector<4x1x8xf32>
    %137 = vector.shape_cast %134 : vector<4x1x8xf32> to vector<1x1x4x1x8xf32>
    tpu.vector_store %arg5[%c0_137, %c2_138, %c0_139, %c0_140, %c24_141], %137 {strides = array<i32>} : memref<1x4x4x1x64xf32, #tpu.memory_space<vmem>>, vector<1x1x4x1x8xf32>,
    %138 = arith.subf %119, %118 : vector<4x1x8xf32>
    %cst_142 = arith.constant 5.000000e-01 : f32
    %139 = vector.broadcast %cst_142 : f32 to vector<4x1x8xf32>
    %140 = arith.mulf %139, %138 : vector<4x1x8xf32>
    %c0_143 = arith.constant 0 : index
    %c3_144 = arith.constant 3 : index
    %c0_145 = arith.constant 0 : index
    %c0_146 = arith.constant 0 : index
    %c24_147 = arith.constant 24 : index
    %141 = vector.load %arg5[%c0_143, %c3_144, %c0_145, %c0_146, %c24_147] : memref<1x4x4x1x64xf32, #tpu.memory_space<vmem>>, vector<1x1x4x1x8xf32>
    %142 = vector.shape_cast %141 : vector<1x1x4x1x8xf32> to vector<4x1x8xf32>
    %143 = vector.shape_cast %140 : vector<4x1x8xf32> to vector<1x1x4x1x8xf32>
    tpu.vector_store %arg5[%c0_143, %c3_144, %c0_145, %c0_146, %c24_147], %143 {strides = array<i32>} : memref<1x4x4x1x64xf32, #tpu.memory_space<vmem>>, vector<1x1x4x1x8xf32>,
    %c0_148 = arith.constant 0 : index
    %c0_149 = arith.constant 0 : index
    %c0_150 = arith.constant 0 : index
    %c64 = arith.constant 64 : index
    %144 = vector.load %arg3[%c0_148, %c0_149, %c0_150, %c64] : memref<1x4x1x128xf32, #tpu.memory_space<vmem>>, vector<1x4x1x8xf32>
    %145 = vector.shape_cast %144 : vector<1x4x1x8xf32> to vector<4x1x8xf32>
    %c0_151 = arith.constant 0 : index
    %c0_152 = arith.constant 0 : index
    %c0_153 = arith.constant 0 : index
    %c72 = arith.constant 72 : index
    %146 = vector.load %arg3[%c0_151, %c0_152, %c0_153, %c72] : memref<1x4x1x128xf32, #tpu.memory_space<vmem>>, vector<1x4x1x8xf32>
    %147 = vector.shape_cast %146 : vector<1x4x1x8xf32> to vector<4x1x8xf32>
    %c0_154 = arith.constant 0 : index
    %c0_155 = arith.constant 0 : index
    %c0_156 = arith.constant 0 : index
    %c64_157 = arith.constant 64 : index
    %148 = vector.load %arg4[%c0_154, %c0_155, %c0_156, %c64_157] : memref<1x4x1x128xf32, #tpu.memory_space<vmem>>, vector<1x4x1x8xf32>
    %149 = vector.shape_cast %148 : vector<1x4x1x8xf32> to vector<4x1x8xf32>
    %c0_158 = arith.constant 0 : index
    %c0_159 = arith.constant 0 : index
    %c0_160 = arith.constant 0 : index
    %c72_161 = arith.constant 72 : index
    %150 = vector.load %arg4[%c0_158, %c0_159, %c0_160, %c72_161] : memref<1x4x1x128xf32, #tpu.memory_space<vmem>>, vector<1x4x1x8xf32>
    %151 = vector.shape_cast %150 : vector<1x4x1x8xf32> to vector<4x1x8xf32>
    %152 = arith.addf %145, %149 : vector<4x1x8xf32>
    %153 = arith.addf %147, %151 : vector<4x1x8xf32>
    %154 = arith.subf %149, %145 : vector<4x1x8xf32>
    %155 = arith.subf %151, %147 : vector<4x1x8xf32>
    %156 = arith.addf %152, %153 : vector<4x1x8xf32>
    %cst_162 = arith.constant 5.000000e-01 : f32
    %157 = vector.broadcast %cst_162 : f32 to vector<4x1x8xf32>
    %158 = arith.mulf %157, %156 : vector<4x1x8xf32>
    %c0_163 = arith.constant 0 : index
    %c0_164 = arith.constant 0 : index
    %c0_165 = arith.constant 0 : index
    %c0_166 = arith.constant 0 : index
    %c32_167 = arith.constant 32 : index
    %159 = vector.load %arg5[%c0_163, %c0_164, %c0_165, %c0_166, %c32_167] : memref<1x4x4x1x64xf32, #tpu.memory_space<vmem>>, vector<1x1x4x1x8xf32>
    %160 = vector.shape_cast %159 : vector<1x1x4x1x8xf32> to vector<4x1x8xf32>
    %161 = vector.shape_cast %158 : vector<4x1x8xf32> to vector<1x1x4x1x8xf32>
    tpu.vector_store %arg5[%c0_163, %c0_164, %c0_165, %c0_166, %c32_167], %161 {strides = array<i32>} : memref<1x4x4x1x64xf32, #tpu.memory_space<vmem>>, vector<1x1x4x1x8xf32>,
    %162 = arith.subf %153, %152 : vector<4x1x8xf32>
    %cst_168 = arith.constant 5.000000e-01 : f32
    %163 = vector.broadcast %cst_168 : f32 to vector<4x1x8xf32>
    %164 = arith.mulf %163, %162 : vector<4x1x8xf32>
    %c0_169 = arith.constant 0 : index
    %c1_170 = arith.constant 1 : index
    %c0_171 = arith.constant 0 : index
    %c0_172 = arith.constant 0 : index
    %c32_173 = arith.constant 32 : index
    %165 = vector.load %arg5[%c0_169, %c1_170, %c0_171, %c0_172, %c32_173] : memref<1x4x4x1x64xf32, #tpu.memory_space<vmem>>, vector<1x1x4x1x8xf32>
    %166 = vector.shape_cast %165 : vector<1x1x4x1x8xf32> to vector<4x1x8xf32>
    %167 = vector.shape_cast %164 : vector<4x1x8xf32> to vector<1x1x4x1x8xf32>
    tpu.vector_store %arg5[%c0_169, %c1_170, %c0_171, %c0_172, %c32_173], %167 {strides = array<i32>} : memref<1x4x4x1x64xf32, #tpu.memory_space<vmem>>, vector<1x1x4x1x8xf32>,
    %168 = arith.addf %154, %155 : vector<4x1x8xf32>
    %cst_174 = arith.constant 5.000000e-01 : f32
    %169 = vector.broadcast %cst_174 : f32 to vector<4x1x8xf32>
    %170 = arith.mulf %169, %168 : vector<4x1x8xf32>
    %c0_175 = arith.constant 0 : index
    %c2_176 = arith.constant 2 : index
    %c0_177 = arith.constant 0 : index
    %c0_178 = arith.constant 0 : index
    %c32_179 = arith.constant 32 : index
    %171 = vector.load %arg5[%c0_175, %c2_176, %c0_177, %c0_178, %c32_179] : memref<1x4x4x1x64xf32, #tpu.memory_space<vmem>>, vector<1x1x4x1x8xf32>
    %172 = vector.shape_cast %171 : vector<1x1x4x1x8xf32> to vector<4x1x8xf32>
    %173 = vector.shape_cast %170 : vector<4x1x8xf32> to vector<1x1x4x1x8xf32>
    tpu.vector_store %arg5[%c0_175, %c2_176, %c0_177, %c0_178, %c32_179], %173 {strides = array<i32>} : memref<1x4x4x1x64xf32, #tpu.memory_space<vmem>>, vector<1x1x4x1x8xf32>,
    %174 = arith.subf %155, %154 : vector<4x1x8xf32>
    %cst_180 = arith.constant 5.000000e-01 : f32
    %175 = vector.broadcast %cst_180 : f32 to vector<4x1x8xf32>
    %176 = arith.mulf %175, %174 : vector<4x1x8xf32>
    %c0_181 = arith.constant 0 : index
    %c3_182 = arith.constant 3 : index
    %c0_183 = arith.constant 0 : index
    %c0_184 = arith.constant 0 : index
    %c32_185 = arith.constant 32 : index
    %177 = vector.load %arg5[%c0_181, %c3_182, %c0_183, %c0_184, %c32_185] : memref<1x4x4x1x64xf32, #tpu.memory_space<vmem>>, vector<1x1x4x1x8xf32>
    %178 = vector.shape_cast %177 : vector<1x1x4x1x8xf32> to vector<4x1x8xf32>
    %179 = vector.shape_cast %176 : vector<4x1x8xf32> to vector<1x1x4x1x8xf32>
    tpu.vector_store %arg5[%c0_181, %c3_182, %c0_183, %c0_184, %c32_185], %179 {strides = array<i32>} : memref<1x4x4x1x64xf32, #tpu.memory_space<vmem>>, vector<1x1x4x1x8xf32>,
    %c0_186 = arith.constant 0 : index
    %c0_187 = arith.constant 0 : index
    %c0_188 = arith.constant 0 : index
    %c80 = arith.constant 80 : index
    %180 = vector.load %arg3[%c0_186, %c0_187, %c0_188, %c80] : memref<1x4x1x128xf32, #tpu.memory_space<vmem>>, vector<1x4x1x8xf32>
    %181 = vector.shape_cast %180 : vector<1x4x1x8xf32> to vector<4x1x8xf32>
    %c0_189 = arith.constant 0 : index
    %c0_190 = arith.constant 0 : index
    %c0_191 = arith.constant 0 : index
    %c88 = arith.constant 88 : index
    %182 = vector.load %arg3[%c0_189, %c0_190, %c0_191, %c88] : memref<1x4x1x128xf32, #tpu.memory_space<vmem>>, vector<1x4x1x8xf32>
    %183 = vector.shape_cast %182 : vector<1x4x1x8xf32> to vector<4x1x8xf32>
    %c0_192 = arith.constant 0 : index
    %c0_193 = arith.constant 0 : index
    %c0_194 = arith.constant 0 : index
    %c80_195 = arith.constant 80 : index
    %184 = vector.load %arg4[%c0_192, %c0_193, %c0_194, %c80_195] : memref<1x4x1x128xf32, #tpu.memory_space<vmem>>, vector<1x4x1x8xf32>
    %185 = vector.shape_cast %184 : vector<1x4x1x8xf32> to vector<4x1x8xf32>
    %c0_196 = arith.constant 0 : index
    %c0_197 = arith.constant 0 : index
    %c0_198 = arith.constant 0 : index
    %c88_199 = arith.constant 88 : index
    %186 = vector.load %arg4[%c0_196, %c0_197, %c0_198, %c88_199] : memref<1x4x1x128xf32, #tpu.memory_space<vmem>>, vector<1x4x1x8xf32>
    %187 = vector.shape_cast %186 : vector<1x4x1x8xf32> to vector<4x1x8xf32>
    %188 = arith.addf %181, %185 : vector<4x1x8xf32>
    %189 = arith.addf %183, %187 : vector<4x1x8xf32>
    %190 = arith.subf %185, %181 : vector<4x1x8xf32>
    %191 = arith.subf %187, %183 : vector<4x1x8xf32>
    %192 = arith.addf %188, %189 : vector<4x1x8xf32>
    %cst_200 = arith.constant 5.000000e-01 : f32
    %193 = vector.broadcast %cst_200 : f32 to vector<4x1x8xf32>
    %194 = arith.mulf %193, %192 : vector<4x1x8xf32>
    %c0_201 = arith.constant 0 : index
    %c0_202 = arith.constant 0 : index
    %c0_203 = arith.constant 0 : index
    %c0_204 = arith.constant 0 : index
    %c40_205 = arith.constant 40 : index
    %195 = vector.load %arg5[%c0_201, %c0_202, %c0_203, %c0_204, %c40_205] : memref<1x4x4x1x64xf32, #tpu.memory_space<vmem>>, vector<1x1x4x1x8xf32>
    %196 = vector.shape_cast %195 : vector<1x1x4x1x8xf32> to vector<4x1x8xf32>
    %197 = vector.shape_cast %194 : vector<4x1x8xf32> to vector<1x1x4x1x8xf32>
    tpu.vector_store %arg5[%c0_201, %c0_202, %c0_203, %c0_204, %c40_205], %197 {strides = array<i32>} : memref<1x4x4x1x64xf32, #tpu.memory_space<vmem>>, vector<1x1x4x1x8xf32>,
    %198 = arith.subf %189, %188 : vector<4x1x8xf32>
    %cst_206 = arith.constant 5.000000e-01 : f32
    %199 = vector.broadcast %cst_206 : f32 to vector<4x1x8xf32>
    %200 = arith.mulf %199, %198 : vector<4x1x8xf32>
    %c0_207 = arith.constant 0 : index
    %c1_208 = arith.constant 1 : index
    %c0_209 = arith.constant 0 : index
    %c0_210 = arith.constant 0 : index
    %c40_211 = arith.constant 40 : index
    %201 = vector.load %arg5[%c0_207, %c1_208, %c0_209, %c0_210, %c40_211] : memref<1x4x4x1x64xf32, #tpu.memory_space<vmem>>, vector<1x1x4x1x8xf32>
    %202 = vector.shape_cast %201 : vector<1x1x4x1x8xf32> to vector<4x1x8xf32>
    %203 = vector.shape_cast %200 : vector<4x1x8xf32> to vector<1x1x4x1x8xf32>
    tpu.vector_store %arg5[%c0_207, %c1_208, %c0_209, %c0_210, %c40_211], %203 {strides = array<i32>} : memref<1x4x4x1x64xf32, #tpu.memory_space<vmem>>, vector<1x1x4x1x8xf32>,
    %204 = arith.addf %190, %191 : vector<4x1x8xf32>
    %cst_212 = arith.constant 5.000000e-01 : f32
    %205 = vector.broadcast %cst_212 : f32 to vector<4x1x8xf32>
    %206 = arith.mulf %205, %204 : vector<4x1x8xf32>
    %c0_213 = arith.constant 0 : index
    %c2_214 = arith.constant 2 : index
    %c0_215 = arith.constant 0 : index
    %c0_216 = arith.constant 0 : index
    %c40_217 = arith.constant 40 : index
    %207 = vector.load %arg5[%c0_213, %c2_214, %c0_215, %c0_216, %c40_217] : memref<1x4x4x1x64xf32, #tpu.memory_space<vmem>>, vector<1x1x4x1x8xf32>
    %208 = vector.shape_cast %207 : vector<1x1x4x1x8xf32> to vector<4x1x8xf32>
    %209 = vector.shape_cast %206 : vector<4x1x8xf32> to vector<1x1x4x1x8xf32>
    tpu.vector_store %arg5[%c0_213, %c2_214, %c0_215, %c0_216, %c40_217], %209 {strides = array<i32>} : memref<1x4x4x1x64xf32, #tpu.memory_space<vmem>>, vector<1x1x4x1x8xf32>,
    %210 = arith.subf %191, %190 : vector<4x1x8xf32>
    %cst_218 = arith.constant 5.000000e-01 : f32
    %211 = vector.broadcast %cst_218 : f32 to vector<4x1x8xf32>
    %212 = arith.mulf %211, %210 : vector<4x1x8xf32>
    %c0_219 = arith.constant 0 : index
    %c3_220 = arith.constant 3 : index
    %c0_221 = arith.constant 0 : index
    %c0_222 = arith.constant 0 : index
    %c40_223 = arith.constant 40 : index
    %213 = vector.load %arg5[%c0_219, %c3_220, %c0_221, %c0_222, %c40_223] : memref<1x4x4x1x64xf32, #tpu.memory_space<vmem>>, vector<1x1x4x1x8xf32>
    %214 = vector.shape_cast %213 : vector<1x1x4x1x8xf32> to vector<4x1x8xf32>
    %215 = vector.shape_cast %212 : vector<4x1x8xf32> to vector<1x1x4x1x8xf32>
    tpu.vector_store %arg5[%c0_219, %c3_220, %c0_221, %c0_222, %c40_223], %215 {strides = array<i32>} : memref<1x4x4x1x64xf32, #tpu.memory_space<vmem>>, vector<1x1x4x1x8xf32>,
    %c0_224 = arith.constant 0 : index
    %c0_225 = arith.constant 0 : index
    %c0_226 = arith.constant 0 : index
    %c96 = arith.constant 96 : index
    %216 = vector.load %arg3[%c0_224, %c0_225, %c0_226, %c96] : memref<1x4x1x128xf32, #tpu.memory_space<vmem>>, vector<1x4x1x8xf32>
    %217 = vector.shape_cast %216 : vector<1x4x1x8xf32> to vector<4x1x8xf32>
    %c0_227 = arith.constant 0 : index
    %c0_228 = arith.constant 0 : index
    %c0_229 = arith.constant 0 : index
    %c104 = arith.constant 104 : index
    %218 = vector.load %arg3[%c0_227, %c0_228, %c0_229, %c104] : memref<1x4x1x128xf32, #tpu.memory_space<vmem>>, vector<1x4x1x8xf32>
    %219 = vector.shape_cast %218 : vector<1x4x1x8xf32> to vector<4x1x8xf32>
    %c0_230 = arith.constant 0 : index
    %c0_231 = arith.constant 0 : index
    %c0_232 = arith.constant 0 : index
    %c96_233 = arith.constant 96 : index
    %220 = vector.load %arg4[%c0_230, %c0_231, %c0_232, %c96_233] : memref<1x4x1x128xf32, #tpu.memory_space<vmem>>, vector<1x4x1x8xf32>
    %221 = vector.shape_cast %220 : vector<1x4x1x8xf32> to vector<4x1x8xf32>
    %c0_234 = arith.constant 0 : index
    %c0_235 = arith.constant 0 : index
    %c0_236 = arith.constant 0 : index
    %c104_237 = arith.constant 104 : index
    %222 = vector.load %arg4[%c0_234, %c0_235, %c0_236, %c104_237] : memref<1x4x1x128xf32, #tpu.memory_space<vmem>>, vector<1x4x1x8xf32>
    %223 = vector.shape_cast %222 : vector<1x4x1x8xf32> to vector<4x1x8xf32>
    %224 = arith.addf %217, %221 : vector<4x1x8xf32>
    %225 = arith.addf %219, %223 : vector<4x1x8xf32>
    %226 = arith.subf %221, %217 : vector<4x1x8xf32>
    %227 = arith.subf %223, %219 : vector<4x1x8xf32>
    %228 = arith.addf %224, %225 : vector<4x1x8xf32>
    %cst_238 = arith.constant 5.000000e-01 : f32
    %229 = vector.broadcast %cst_238 : f32 to vector<4x1x8xf32>
    %230 = arith.mulf %229, %228 : vector<4x1x8xf32>
    %c0_239 = arith.constant 0 : index
    %c0_240 = arith.constant 0 : index
    %c0_241 = arith.constant 0 : index
    %c0_242 = arith.constant 0 : index
    %c48_243 = arith.constant 48 : index
    %231 = vector.load %arg5[%c0_239, %c0_240, %c0_241, %c0_242, %c48_243] : memref<1x4x4x1x64xf32, #tpu.memory_space<vmem>>, vector<1x1x4x1x8xf32>
    %232 = vector.shape_cast %231 : vector<1x1x4x1x8xf32> to vector<4x1x8xf32>
    %233 = vector.shape_cast %230 : vector<4x1x8xf32> to vector<1x1x4x1x8xf32>
    tpu.vector_store %arg5[%c0_239, %c0_240, %c0_241, %c0_242, %c48_243], %233 {strides = array<i32>} : memref<1x4x4x1x64xf32, #tpu.memory_space<vmem>>, vector<1x1x4x1x8xf32>,
    %234 = arith.subf %225, %224 : vector<4x1x8xf32>
    %cst_244 = arith.constant 5.000000e-01 : f32
    %235 = vector.broadcast %cst_244 : f32 to vector<4x1x8xf32>
    %236 = arith.mulf %235, %234 : vector<4x1x8xf32>
    %c0_245 = arith.constant 0 : index
    %c1_246 = arith.constant 1 : index
    %c0_247 = arith.constant 0 : index
    %c0_248 = arith.constant 0 : index
    %c48_249 = arith.constant 48 : index
    %237 = vector.load %arg5[%c0_245, %c1_246, %c0_247, %c0_248, %c48_249] : memref<1x4x4x1x64xf32, #tpu.memory_space<vmem>>, vector<1x1x4x1x8xf32>
    %238 = vector.shape_cast %237 : vector<1x1x4x1x8xf32> to vector<4x1x8xf32>
    %239 = vector.shape_cast %236 : vector<4x1x8xf32> to vector<1x1x4x1x8xf32>
    tpu.vector_store %arg5[%c0_245, %c1_246, %c0_247, %c0_248, %c48_249], %239 {strides = array<i32>} : memref<1x4x4x1x64xf32, #tpu.memory_space<vmem>>, vector<1x1x4x1x8xf32>,
    %240 = arith.addf %226, %227 : vector<4x1x8xf32>
    %cst_250 = arith.constant 5.000000e-01 : f32
    %241 = vector.broadcast %cst_250 : f32 to vector<4x1x8xf32>
    %242 = arith.mulf %241, %240 : vector<4x1x8xf32>
    %c0_251 = arith.constant 0 : index
    %c2_252 = arith.constant 2 : index
    %c0_253 = arith.constant 0 : index
    %c0_254 = arith.constant 0 : index
    %c48_255 = arith.constant 48 : index
    %243 = vector.load %arg5[%c0_251, %c2_252, %c0_253, %c0_254, %c48_255] : memref<1x4x4x1x64xf32, #tpu.memory_space<vmem>>, vector<1x1x4x1x8xf32>
    %244 = vector.shape_cast %243 : vector<1x1x4x1x8xf32> to vector<4x1x8xf32>
    %245 = vector.shape_cast %242 : vector<4x1x8xf32> to vector<1x1x4x1x8xf32>
    tpu.vector_store %arg5[%c0_251, %c2_252, %c0_253, %c0_254, %c48_255], %245 {strides = array<i32>} : memref<1x4x4x1x64xf32, #tpu.memory_space<vmem>>, vector<1x1x4x1x8xf32>,
    %246 = arith.subf %227, %226 : vector<4x1x8xf32>
    %cst_256 = arith.constant 5.000000e-01 : f32
    %247 = vector.broadcast %cst_256 : f32 to vector<4x1x8xf32>
    %248 = arith.mulf %247, %246 : vector<4x1x8xf32>
    %c0_257 = arith.constant 0 : index
    %c3_258 = arith.constant 3 : index
    %c0_259 = arith.constant 0 : index
    %c0_260 = arith.constant 0 : index
    %c48_261 = arith.constant 48 : index
    %249 = vector.load %arg5[%c0_257, %c3_258, %c0_259, %c0_260, %c48_261] : memref<1x4x4x1x64xf32, #tpu.memory_space<vmem>>, vector<1x1x4x1x8xf32>
    %250 = vector.shape_cast %249 : vector<1x1x4x1x8xf32> to vector<4x1x8xf32>
    %251 = vector.shape_cast %248 : vector<4x1x8xf32> to vector<1x1x4x1x8xf32>
    tpu.vector_store %arg5[%c0_257, %c3_258, %c0_259, %c0_260, %c48_261], %251 {strides = array<i32>} : memref<1x4x4x1x64xf32, #tpu.memory_space<vmem>>, vector<1x1x4x1x8xf32>,
    %c0_262 = arith.constant 0 : index
    %c0_263 = arith.constant 0 : index
    %c0_264 = arith.constant 0 : index
    %c112 = arith.constant 112 : index
    %252 = vector.load %arg3[%c0_262, %c0_263, %c0_264, %c112] : memref<1x4x1x128xf32, #tpu.memory_space<vmem>>, vector<1x4x1x8xf32>
    %253 = vector.shape_cast %252 : vector<1x4x1x8xf32> to vector<4x1x8xf32>
    %c0_265 = arith.constant 0 : index
    %c0_266 = arith.constant 0 : index
    %c0_267 = arith.constant 0 : index
    %c120 = arith.constant 120 : index
    %254 = vector.load %arg3[%c0_265, %c0_266, %c0_267, %c120] : memref<1x4x1x128xf32, #tpu.memory_space<vmem>>, vector<1x4x1x8xf32>
    %255 = vector.shape_cast %254 : vector<1x4x1x8xf32> to vector<4x1x8xf32>
    %c0_268 = arith.constant 0 : index
    %c0_269 = arith.constant 0 : index
    %c0_270 = arith.constant 0 : index
    %c112_271 = arith.constant 112 : index
    %256 = vector.load %arg4[%c0_268, %c0_269, %c0_270, %c112_271] : memref<1x4x1x128xf32, #tpu.memory_space<vmem>>, vector<1x4x1x8xf32>
    %257 = vector.shape_cast %256 : vector<1x4x1x8xf32> to vector<4x1x8xf32>
    %c0_272 = arith.constant 0 : index
    %c0_273 = arith.constant 0 : index
    %c0_274 = arith.constant 0 : index
    %c120_275 = arith.constant 120 : index
    %258 = vector.load %arg4[%c0_272, %c0_273, %c0_274, %c120_275] : memref<1x4x1x128xf32, #tpu.memory_space<vmem>>, vector<1x4x1x8xf32>
    %259 = vector.shape_cast %258 : vector<1x4x1x8xf32> to vector<4x1x8xf32>
    %260 = arith.addf %253, %257 : vector<4x1x8xf32>
    %261 = arith.addf %255, %259 : vector<4x1x8xf32>
    %262 = arith.subf %257, %253 : vector<4x1x8xf32>
    %263 = arith.subf %259, %255 : vector<4x1x8xf32>
    %264 = arith.addf %260, %261 : vector<4x1x8xf32>
    %cst_276 = arith.constant 5.000000e-01 : f32
    %265 = vector.broadcast %cst_276 : f32 to vector<4x1x8xf32>
    %266 = arith.mulf %265, %264 : vector<4x1x8xf32>
    %c0_277 = arith.constant 0 : index
    %c0_278 = arith.constant 0 : index
    %c0_279 = arith.constant 0 : index
    %c0_280 = arith.constant 0 : index
    %c56_281 = arith.constant 56 : index
    %267 = vector.load %arg5[%c0_277, %c0_278, %c0_279, %c0_280, %c56_281] : memref<1x4x4x1x64xf32, #tpu.memory_space<vmem>>, vector<1x1x4x1x8xf32>
    %268 = vector.shape_cast %267 : vector<1x1x4x1x8xf32> to vector<4x1x8xf32>
    %269 = vector.shape_cast %266 : vector<4x1x8xf32> to vector<1x1x4x1x8xf32>
    tpu.vector_store %arg5[%c0_277, %c0_278, %c0_279, %c0_280, %c56_281], %269 {strides = array<i32>} : memref<1x4x4x1x64xf32, #tpu.memory_space<vmem>>, vector<1x1x4x1x8xf32>,
    %270 = arith.subf %261, %260 : vector<4x1x8xf32>
    %cst_282 = arith.constant 5.000000e-01 : f32
    %271 = vector.broadcast %cst_282 : f32 to vector<4x1x8xf32>
    %272 = arith.mulf %271, %270 : vector<4x1x8xf32>
    %c0_283 = arith.constant 0 : index
    %c1_284 = arith.constant 1 : index
    %c0_285 = arith.constant 0 : index
    %c0_286 = arith.constant 0 : index
    %c56_287 = arith.constant 56 : index
    %273 = vector.load %arg5[%c0_283, %c1_284, %c0_285, %c0_286, %c56_287] : memref<1x4x4x1x64xf32, #tpu.memory_space<vmem>>, vector<1x1x4x1x8xf32>
    %274 = vector.shape_cast %273 : vector<1x1x4x1x8xf32> to vector<4x1x8xf32>
    %275 = vector.shape_cast %272 : vector<4x1x8xf32> to vector<1x1x4x1x8xf32>
    tpu.vector_store %arg5[%c0_283, %c1_284, %c0_285, %c0_286, %c56_287], %275 {strides = array<i32>} : memref<1x4x4x1x64xf32, #tpu.memory_space<vmem>>, vector<1x1x4x1x8xf32>,
    %276 = arith.addf %262, %263 : vector<4x1x8xf32>
    %cst_288 = arith.constant 5.000000e-01 : f32
    %277 = vector.broadcast %cst_288 : f32 to vector<4x1x8xf32>
    %278 = arith.mulf %277, %276 : vector<4x1x8xf32>
    %c0_289 = arith.constant 0 : index
    %c2_290 = arith.constant 2 : index
    %c0_291 = arith.constant 0 : index
    %c0_292 = arith.constant 0 : index
    %c56_293 = arith.constant 56 : index
    %279 = vector.load %arg5[%c0_289, %c2_290, %c0_291, %c0_292, %c56_293] : memref<1x4x4x1x64xf32, #tpu.memory_space<vmem>>, vector<1x1x4x1x8xf32>
    %280 = vector.shape_cast %279 : vector<1x1x4x1x8xf32> to vector<4x1x8xf32>
    %281 = vector.shape_cast %278 : vector<4x1x8xf32> to vector<1x1x4x1x8xf32>
    tpu.vector_store %arg5[%c0_289, %c2_290, %c0_291, %c0_292, %c56_293], %281 {strides = array<i32>} : memref<1x4x4x1x64xf32, #tpu.memory_space<vmem>>, vector<1x1x4x1x8xf32>,
    %282 = arith.subf %263, %262 : vector<4x1x8xf32>
    %cst_294 = arith.constant 5.000000e-01 : f32
    %283 = vector.broadcast %cst_294 : f32 to vector<4x1x8xf32>
    %284 = arith.mulf %283, %282 : vector<4x1x8xf32>
    %c0_295 = arith.constant 0 : index
    %c3_296 = arith.constant 3 : index
    %c0_297 = arith.constant 0 : index
    %c0_298 = arith.constant 0 : index
    %c56_299 = arith.constant 56 : index
    %285 = vector.load %arg5[%c0_295, %c3_296, %c0_297, %c0_298, %c56_299] : memref<1x4x4x1x64xf32, #tpu.memory_space<vmem>>, vector<1x1x4x1x8xf32>
    %286 = vector.shape_cast %285 : vector<1x1x4x1x8xf32> to vector<4x1x8xf32>
    %287 = vector.shape_cast %284 : vector<4x1x8xf32> to vector<1x1x4x1x8xf32>
    tpu.vector_store %arg5[%c0_295, %c3_296, %c0_297, %c0_298, %c56_299], %287 {strides = array<i32>} : memref<1x4x4x1x64xf32, #tpu.memory_space<vmem>>, vector<1x1x4x1x8xf32>,
    return
  }
  func.func @transform_0(%arg0: i32, %arg1: i32, %arg2: i32) -> (i32, i32, i32, i32) {
    %c0_i32 = arith.constant 0 : i32
    %c0_i32_0 = arith.constant 0 : i32
    return %arg0, %arg1, %arg2, %c0_i32 : i32, i32, i32, i32
  }
  func.func @transform_1(%arg0: i32, %arg1: i32, %arg2: i32) -> (i32, i32, i32, i32) {
    %c0_i32 = arith.constant 0 : i32
    %c0_i32_0 = arith.constant 0 : i32
    return %arg0, %arg1, %arg2, %c0_i32 : i32, i32, i32, i32
  }
  func.func @transform_2(%arg0: i32, %arg1: i32, %arg2: i32) -> (i32, i32, i32, i32, i32) {
    %c0_i32 = arith.constant 0 : i32
    %c0_i32_0 = arith.constant 0 : i32
    %c0_i32_1 = arith.constant 0 : i32
    return %arg0, %c0_i32, %arg1, %arg2, %c0_i32_0 : i32, i32, i32, i32, i32
  }
}

</mosaic_0001>

<llo_original>
// kernel: parity_fn.1
$region0: #{parity_fn.1}
  #allocation0 [shape = 'u32[]', space=smem, size = 0x4, offset = 0x4, fixed_abs, tag = 'smem constant byte address 0x4 - core index']
  #allocation1 [shape = 'u32[72,128]{1,0:T(1,128)}', space=vmem, size = 0x9000, scoped, tag = 'internal scratch']
  %s0 = inlined_call_operand.vmem [shape: f32[2,4,1,128], index: 0, kind: input, shape index: {}]
  %s1 = inlined_call_operand.vmem [shape: f32[2,4,1,128], index: 1, kind: input, shape index: {}]
  %s2 = inlined_call_operand.vmem [shape: f32[2,4,4,1,64], index: 2, kind: output, shape index: {}]
  %s3 = sld [smem:[#allocation0]]
  $region41: #{parity_fn.1} parent=0
    _
  %s5 = ssub.s32 1, %s3
  %s6 = scalar_select 0, %s5, %s3
  loop: start=0, step=1, limit=4
  $region2: #{parity_fn.1} parent=0 // loop_pre_header
    _
  $region3: #{parity_fn.1} parent=0 // loop_header
    %s8 = sphi 0, %s12
    %p9 = scmp.ge.s32.totalorder %s8, 4
    %s15 = sphi 0, %s34
    %s16 = sphi 0, %s30
    %s17 = sphi 0, %s26
    %s18 = sphi 0, %s15
    %s19 = sphi 0, %s16
    %s20 = sphi 0, %s17
    %s21 = sphi 0, %s18
    %s22 = sphi 0, %s19
    %s23 = sphi 0, %s20
    %s41 = sphi 0, %s43
    %s44 = sphi 0, %s41
    %s45 = sphi 0, %s44
    %s61 = sphi 0, %s45
    %s71 = sphi 0, %s73
    %s74 = sphi 0, %s71
    %s75 = sphi 0, %s74
    %s91 = sphi 0, %s75
    %s101 = sphi 0, %s103
    %s104 = sphi 0, %s101
    %s105 = sphi 0, %s104
    %s121 = sphi 0, %s105
  $region4: #{parity_fn.1} parent=0 // loop_header_branch
    %11 = sbr.rel (%p9) target = $region8
  $region5: #{parity_fn.1} parent=0 // loop_body
    %s13 = ssub.s32 %s8, 1
    %s14 = ssub.s32 %s8, 2
    %s24 = sadd.s32 1, %s17
    %p25 = scmp.ge.s32.totalorder %s24, 1
    %s26 = scalar_select %p25, 0, %s24
    %s27 = sadd.s32 1, %s16
    %s28 = scalar_select %p25, %s27, %s16
    %p29 = scmp.ge.s32.totalorder %s28, 1
    %s30 = scalar_select %p29, 0, %s28
    %s31 = sadd.s32 1, %s15
    %s32 = scalar_select %p29, %s31, %s15
    %p33 = scmp.ge.s32.totalorder %s32, 2
    %s34 = scalar_select %p33, 0, %s32
    %s35 = ssub.s32 %s15, %s34
    %s36 = ssub.s32 %s16, %s30
    %s37 = sor.u32 %s35, %s36
    %s38 = ssub.s32 %s17, %s26
    %s39 = sor.u32 %s37, %s38
    %p40 = scmp.eq.s32.totalorder %s39, 0
    %s42 = sadd.s32 %s41, 1
    %s43 = scalar_select %p40, %s41, %s42
    %p46 = pneg %p40
    %p47 = scmp.eq.s32.totalorder %s8, 1
    %p48 = por %p46, %p47
    %p49 = scmp.ne.s32.totalorder %s41, %s44
    %p50 = scmp.eq.s32.totalorder %s8, 0
    %p51 = por %p49, %p50
    %p52 = scmp.ne.s32.totalorder %s41, %s44
    %p53 = scmp.eq.s32.totalorder %s13, 1
    %p54 = por %p52, %p53
    %p55 = scmp.ne.s32.totalorder %s44, %s45
    %p56 = scmp.eq.s32.totalorder %s13, 0
    %p57 = por %p55, %p56
    %p58 = scmp.ne.s32.totalorder %s44, %s45
    %p59 = scmp.eq.s32.totalorder %s14, 1
    %p60 = por %p58, %p59
    %p62 = scmp.ne.s32.totalorder %s45, %s61
    %p63 = scmp.eq.s32.totalorder %s14, 0
    %p64 = por %p62, %p63
    %s65 = ssub.s32 %s15, %s34
    %s66 = ssub.s32 %s16, %s30
    %s67 = sor.u32 %s65, %s66
    %s68 = ssub.s32 %s17, %s26
    %s69 = sor.u32 %s67, %s68
    %p70 = scmp.eq.s32.totalorder %s69, 0
    %s72 = sadd.s32 %s71, 1
    %s73 = scalar_select %p70, %s71, %s72
    %p76 = pneg %p70
    %p77 = scmp.eq.s32.totalorder %s8, 1
    %p78 = por %p76, %p77
    %p79 = scmp.ne.s32.totalorder %s71, %s74
    %p80 = scmp.eq.s32.totalorder %s8, 0
    %p81 = por %p79, %p80
    %p82 = scmp.ne.s32.totalorder %s71, %s74
    %p83 = scmp.eq.s32.totalorder %s13, 1
    %p84 = por %p82, %p83
    %p85 = scmp.ne.s32.totalorder %s74, %s75
    %p86 = scmp.eq.s32.totalorder %s13, 0
    %p87 = por %p85, %p86
    %p88 = scmp.ne.s32.totalorder %s74, %s75
    %p89 = scmp.eq.s32.totalorder %s14, 1
    %p90 = por %p88, %p89
    %p92 = scmp.ne.s32.totalorder %s75, %s91
    %p93 = scmp.eq.s32.totalorder %s14, 0
    %p94 = por %p92, %p93
    %s95 = ssub.s32 %s15, %s34
    %s96 = ssub.s32 %s16, %s30
    %s97 = sor.u32 %s95, %s96
    %s98 = ssub.s32 %s17, %s26
    %s99 = sor.u32 %s97, %s98
    %p100 = scmp.eq.s32.totalorder %s99, 0
    %s102 = sadd.s32 %s101, 1
    %s103 = scalar_select %p100, %s101, %s102
    %p106 = pneg %p100
    %p107 = scmp.eq.s32.totalorder %s8, 1
    %p108 = por %p106, %p107
    %p109 = scmp.ne.s32.totalorder %s101, %s104
    %p110 = scmp.eq.s32.totalorder %s8, 0
    %p111 = por %p109, %p110
    %p112 = scmp.ne.s32.totalorder %s101, %s104
    %p113 = scmp.eq.s32.totalorder %s13, 1
    %p114 = por %p112, %p113
    %p115 = scmp.ne.s32.totalorder %s104, %s105
    %p116 = scmp.eq.s32.totalorder %s13, 0
    %p117 = por %p115, %p116
    %p118 = scmp.ne.s32.totalorder %s104, %s105
    %p119 = scmp.eq.s32.totalorder %s14, 1
    %p120 = por %p118, %p119
    %p122 = scmp.ne.s32.totalorder %s105, %s121
    %p123 = scmp.eq.s32.totalorder %s14, 0
    %p124 = por %p122, %p123
    %p125 = scmp.le.s32.totalorder 1, %s8
    %p126 = scmp.lt.s32.totalorder %s8, 3
    %p127 = pnand %p125, %p126
    %p128 = pneg %p127
    // Predicated region
    $region9: #{parity_fn.1} parent=5 // pred_check
      _
    $region10: #{parity_fn.1} parent=5 // pred_check_branch
      %130 = sbr.rel (%p127) target = $region12
    $region11: #{parity_fn.1} parent=5 // pred_region
      %s131 = ssub.s32 %s8, 1
    $region12: #{parity_fn.1} parent=5 // pred_fallthru
      _
    %p132 = scmp.lt.s32.totalorder %s8, 2
    // Predicated region
    $region13: #{parity_fn.1} parent=5 // pred_check
      %p133 = pneg %p132
    $region14: #{parity_fn.1} parent=5 // pred_check_branch
      %135 = sbr.rel (%p133) target = $region16
    $region15: #{parity_fn.1} parent=5 // pred_region
      // Predicated region
      $region17: #{parity_fn.1} parent=15 // pred_check
        %p136 = pneg %p51
      $region18: #{parity_fn.1} parent=15 // pred_check_branch
        %138 = sbr.rel (%p136) target = $region20
      $region19: #{parity_fn.1} parent=15 // pred_region
        %s139 = smul.u32 4, %s16
        %p140 = scmp.lt.s32.totalorder %s15, 1
        %s141 = scalar_select %p140, %s15, 1
        %p142 = scmp.lt.s32.totalorder %s139, 3
        %s143 = scalar_select %p142, %s139, 3
        %p144 = scmp.lt.s32.totalorder %s17, 0
        %s145 = scalar_select %p144, %s17, 0
        %s146 = sadd.s32 %s145, %s143
        %s147 = smul.addr %s141, 4
        %s148 = sadd.s32 %s146, %s147
        %s149 = scalar_lea.vmem %s0, %s148
        %s150 = smul.u32 4, %s16
      $region20: #{parity_fn.1} parent=15 // pred_fallthru
        _
      // Predicated region
      $region21: #{parity_fn.1} parent=15 // pred_check
        %p151 = pneg %p81
      $region22: #{parity_fn.1} parent=15 // pred_check_branch
        %153 = sbr.rel (%p151) target = $region24
      $region23: #{parity_fn.1} parent=15 // pred_region
        %s154 = smul.u32 4, %s16
        %p155 = scmp.lt.s32.totalorder %s15, 1
        %s156 = scalar_select %p155, %s15, 1
        %p157 = scmp.lt.s32.totalorder %s154, 3
        %s158 = scalar_select %p157, %s154, 3
        %p159 = scmp.lt.s32.totalorder %s17, 0
        %s160 = scalar_select %p159, %s17, 0
        %s161 = sadd.s32 %s160, %s158
        %s162 = smul.addr %s156, 4
        %s163 = sadd.s32 %s161, %s162
        %s164 = scalar_lea.vmem %s1, %s163
        %s165 = smul.u32 4, %s16
      $region24: #{parity_fn.1} parent=15 // pred_fallthru
        _
    $region16: #{parity_fn.1} parent=5 // pred_fallthru
      _
    %p166 = scmp.le.s32.totalorder 1, %s8
    %p167 = scmp.lt.s32.totalorder %s8, 3
    %p168 = pnand %p166, %p167
    %p169 = pneg %p168
    // Predicated region
    $region25: #{parity_fn.1} parent=5 // pred_check
      _
    $region26: #{parity_fn.1} parent=5 // pred_check_branch
      %171 = sbr.rel (%p168) target = $region28
    $region27: #{parity_fn.1} parent=5 // pred_region
      %s172 = ssub.s32 %s8, 1
      %s173 = smul.u32 4, %s19
      %p174 = scmp.lt.s32.totalorder %s18, 1
      %s175 = scalar_select %p174, %s18, 1
      %p176 = scmp.lt.s32.totalorder %s173, 3
      %s177 = scalar_select %p176, %s173, 3
      %p178 = scmp.lt.s32.totalorder %s20, 0
      %s179 = scalar_select %p178, %s20, 0
      %s180 = sadd.s32 %s179, %s177
      %s181 = smul.addr %s175, 4
      %s182 = sadd.s32 %s180, %s181
      %s183 = scalar_lea.vmem %s0, %s182
      %p184 = pneg %p57
      %p185 = pneg %p54
      %s186 = smul.u32 4, %s19
      %p187 = scmp.lt.s32.totalorder %s18, 1
      %s188 = scalar_select %p187, %s18, 1
      %p189 = scmp.lt.s32.totalorder %s186, 3
      %s190 = scalar_select %p189, %s186, 3
      %p191 = scmp.lt.s32.totalorder %s20, 0
      %s192 = scalar_select %p191, %s20, 0
      %s193 = sadd.s32 %s192, %s190
      %s194 = smul.addr %s188, 4
      %s195 = sadd.s32 %s193, %s194
      %s196 = scalar_lea.vmem %s1, %s195
      %p197 = pneg %p87
      %p198 = pneg %p84
      %p199 = pneg %p117
      %p200 = pneg %p114
      %s201 = smul.u32 4, %s19
      %p202 = scmp.lt.s32.totalorder %s18, 1
      %s203 = scalar_select %p202, %s18, 1
      %p204 = scmp.lt.s32.totalorder %s201, 3
      %s205 = scalar_select %p204, %s201, 3
      %p206 = scmp.lt.s32.totalorder %s20, 0
      %s207 = scalar_select %p206, %s20, 0
      %s208 = sadd.s32 %s207, %s205
      %s209 = smul.addr %s203, 16
      %s210 = sadd.s32 %s208, %s209
      %s211 = scalar_lea.vmem %s2, %s210
      %s212 = smul.u32 4, %s19
      %p213 = scmp.lt.s32.totalorder %s18, 1
      %s214 = scalar_select %p213, %s18, 1
      %p215 = scmp.lt.s32.totalorder %s212, 3
      %s216 = scalar_select %p215, %s212, 3
      %p217 = scmp.lt.s32.totalorder %s20, 0
      %s218 = scalar_select %p217, %s20, 0
      %s219 = sadd.s32 %s218, %s216
      %s220 = smul.addr %s214, 4
      %s221 = sadd.s32 %s219, %s220
      %s222 = scalar_lea.vmem %s0, %s221
      %s223 = smul.u32 4, %s19
      %s224 = smul.u32 4, %s19
      %p225 = scmp.lt.s32.totalorder %s18, 1
      %s226 = scalar_select %p225, %s18, 1
      %p227 = scmp.lt.s32.totalorder %s224, 3
      %s228 = scalar_select %p227, %s224, 3
      %p229 = scmp.lt.s32.totalorder %s20, 0
      %s230 = scalar_select %p229, %s20, 0
      %s231 = sadd.s32 %s230, %s228
      %s232 = smul.addr %s226, 4
      %s233 = sadd.s32 %s231, %s232
      %s234 = scalar_lea.vmem %s1, %s233
      %s235 = smul.u32 4, %s19
      %s236 = smul.u32 4, %s19
      %p237 = scmp.lt.s32.totalorder %s18, 1
      %s238 = scalar_select %p237, %s18, 1
      %p239 = scmp.lt.s32.totalorder %s236, 3
      %s240 = scalar_select %p239, %s236, 3
      %p241 = scmp.lt.s32.totalorder %s20, 0
      %s242 = scalar_select %p241, %s20, 0
      %s243 = sadd.s32 %s242, %s240
      %s244 = smul.addr %s238, 16
      %s245 = sadd.s32 %s243, %s244
      %s246 = scalar_lea.vmem %s2, %s245
      %s247 = smul.u32 4, %s19
      %v248 = vld [vmem:[%s222] sm:$0x1]
      %v249 = vld [vmem:[%s222 + $0x1] sm:$0x1]
      %v250 = vld [vmem:[%s222 + $0x2] sm:$0x1]
      %v251 = vld [vmem:[%s222 + $0x3] sm:$0x1]
      %v252 = vld [vmem:[%s234] sm:$0x1]
      %v253 = vld [vmem:[%s234 + $0x1] sm:$0x1]
      %v254 = vld [vmem:[%s234 + $0x2] sm:$0x1]
      %v255 = vld [vmem:[%s234 + $0x3] sm:$0x1]
      %v256 = vadd.f32 %v248, %v252
      %v257 = vadd.f32 %v249, %v253
      %v258 = vadd.f32 %v250, %v254
      %v259 = vadd.f32 %v251, %v255
      %v260 = vsub.f32 %v252, %v248
      %v261 = vsub.f32 %v253, %v249
      %v262 = vsub.f32 %v254, %v250
      %v263 = vsub.f32 %v255, %v251
      %268 = vrot.lane.b32.xlu0 %v256, 120
      %v269 = vpop.permute.xlu0 %268
      %270 = vrot.lane.b32.xlu0 %v257, 120
      %v271 = vpop.permute.xlu0 %270
      %272 = vrot.lane.b32.xlu0 %v258, 120
      %v273 = vpop.permute.xlu0 %272
      %274 = vrot.lane.b32.xlu0 %v259, 120
      %v275 = vpop.permute.xlu0 %274
      %v280 = vadd.f32 %v256, %v269
      %v281 = vadd.f32 %v257, %v271
      %v282 = vadd.f32 %v258, %v273
      %v283 = vadd.f32 %v259, %v275
      %v284 = vmul.f32 %v280, 0.5
      %v285 = vmul.f32 %v281, 0.5
      %v286 = vmul.f32 %v282, 0.5
      %v287 = vmul.f32 %v283, 0.5
      %vm288 = vcmask 57344
      %289 = vst.msk [vmem:[%s246] sm:$0x1] %vm288, %v284
      %290 = vst.msk [vmem:[%s246 + $0x1] sm:$0x1] %vm288, %v285
      %291 = vst.msk [vmem:[%s246 + $0x2] sm:$0x1] %vm288, %v286
      %292 = vst.msk [vmem:[%s246 + $0x3] sm:$0x1] %vm288, %v287
      %293 = vrot.lane.b32.xlu0 %v256, 8
      %v294 = vpop.permute.xlu0 %293
      %295 = vrot.lane.b32.xlu0 %v257, 8
      %v296 = vpop.permute.xlu0 %295
      %297 = vrot.lane.b32.xlu0 %v258, 8
      %v298 = vpop.permute.xlu0 %297
      %299 = vrot.lane.b32.xlu0 %v259, 8
      %v300 = vpop.permute.xlu0 %299
      %v305 = vsub.f32 %v256, %v294
      %v306 = vsub.f32 %v257, %v296
      %v307 = vsub.f32 %v258, %v298
      %v308 = vsub.f32 %v259, %v300
      %v309 = vmul.f32 %v305, 0.5
      %v310 = vmul.f32 %v306, 0.5
      %v311 = vmul.f32 %v307, 0.5
      %v312 = vmul.f32 %v308, 0.5
      %v317 = vperm.slane %v309, 0
      %v318 = vperm.slane %v310, 0
      %v319 = vperm.slane %v311, 0
      %v320 = vperm.slane %v312, 0
      %321 = vrot.lane.b32.xlu0 %v317, 120
      %v322 = vpop.permute.xlu0 %321
      %323 = vrot.lane.b32.xlu0 %v318, 120
      %v324 = vpop.permute.xlu0 %323
      %325 = vrot.lane.b32.xlu0 %v319, 120
      %v326 = vpop.permute.xlu0 %325
      %327 = vrot.lane.b32.xlu0 %v320, 120
      %v328 = vpop.permute.xlu0 %327
      %s333 = scalar_lea.vmem %s246, 4
      %334 = vst.msk [vmem:[%s333] sm:$0x1] %vm288, %v322
      %335 = vst.msk [vmem:[%s333 + $0x1] sm:$0x1] %vm288, %v324
      %336 = vst.msk [vmem:[%s333 + $0x2] sm:$0x1] %vm288, %v326
      %337 = vst.msk [vmem:[%s333 + $0x3] sm:$0x1] %vm288, %v328
      %342 = vrot.lane.b32.xlu0 %v260, 120
      %v343 = vpop.permute.xlu0 %342
      %344 = vrot.lane.b32.xlu0 %v261, 120
      %v345 = vpop.permute.xlu0 %344
      %346 = vrot.lane.b32.xlu0 %v262, 120
      %v347 = vpop.permute.xlu0 %346
      %348 = vrot.lane.b32.xlu0 %v263, 120
      %v349 = vpop.permute.xlu0 %348
      %v354 = vadd.f32 %v260, %v343
      %v355 = vadd.f32 %v261, %v345
      %v356 = vadd.f32 %v262, %v347
      %v357 = vadd.f32 %v263, %v349
      %v358 = vmul.f32 %v354, 0.5
      %v359 = vmul.f32 %v355, 0.5
      %v360 = vmul.f32 %v356, 0.5
      %v361 = vmul.f32 %v357, 0.5
      %s362 = scalar_lea.vmem %s246, 8
      %363 = vst.msk [vmem:[%s362] sm:$0x1] %vm288, %v358
      %364 = vst.msk [vmem:[%s362 + $0x1] sm:$0x1] %vm288, %v359
      %365 = vst.msk [vmem:[%s362 + $0x2] sm:$0x1] %vm288, %v360
      %366 = vst.msk [vmem:[%s362 + $0x3] sm:$0x1] %vm288, %v361
      %367 = vrot.lane.b32.xlu0 %v260, 8
      %v368 = vpop.permute.xlu0 %367
      %369 = vrot.lane.b32.xlu0 %v261, 8
      %v370 = vpop.permute.xlu0 %369
      %371 = vrot.lane.b32.xlu0 %v262, 8
      %v372 = vpop.permute.xlu0 %371
      %373 = vrot.lane.b32.xlu0 %v263, 8
      %v374 = vpop.permute.xlu0 %373
      %v379 = vsub.f32 %v260, %v368
      %v380 = vsub.f32 %v261, %v370
      %v381 = vsub.f32 %v262, %v372
      %v382 = vsub.f32 %v263, %v374
      %v383 = vmul.f32 %v379, 0.5
      %v384 = vmul.f32 %v380, 0.5
      %v385 = vmul.f32 %v381, 0.5
      %v386 = vmul.f32 %v382, 0.5
      %v391 = vperm.slane %v383, 0
      %v392 = vperm.slane %v384, 0
      %v393 = vperm.slane %v385, 0
      %v394 = vperm.slane %v386, 0
      %395 = vrot.lane.b32.xlu0 %v391, 120
      %v396 = vpop.permute.xlu0 %395
      %397 = vrot.lane.b32.xlu0 %v392, 120
      %v398 = vpop.permute.xlu0 %397
      %399 = vrot.lane.b32.xlu0 %v393, 120
      %v400 = vpop.permute.xlu0 %399
      %401 = vrot.lane.b32.xlu0 %v394, 120
      %v402 = vpop.permute.xlu0 %401
      %s407 = scalar_lea.vmem %s246, 12
      %408 = vst.msk [vmem:[%s407] sm:$0x1] %vm288, %v396
      %409 = vst.msk [vmem:[%s407 + $0x1] sm:$0x1] %vm288, %v398
      %410 = vst.msk [vmem:[%s407 + $0x2] sm:$0x1] %vm288, %v400
      %411 = vst.msk [vmem:[%s407 + $0x3] sm:$0x1] %vm288, %v402
      %v412 = vld [vmem:[%s222] sm:$0x1]
      %v413 = vld [vmem:[%s222 + $0x1] sm:$0x1]
      %v414 = vld [vmem:[%s222 + $0x2] sm:$0x1]
      %v415 = vld [vmem:[%s222 + $0x3] sm:$0x1]
      %v416 = vld [vmem:[%s234] sm:$0x1]
      %v417 = vld [vmem:[%s234 + $0x1] sm:$0x1]
      %v418 = vld [vmem:[%s234 + $0x2] sm:$0x1]
      %v419 = vld [vmem:[%s234 + $0x3] sm:$0x1]
      %v420 = vadd.f32 %v412, %v416
      %v421 = vadd.f32 %v413, %v417
      %v422 = vadd.f32 %v414, %v418
      %v423 = vadd.f32 %v415, %v419
      %v424 = vsub.f32 %v416, %v412
      %v425 = vsub.f32 %v417, %v413
      %v426 = vsub.f32 %v418, %v414
      %v427 = vsub.f32 %v419, %v415
      %432 = vrot.lane.b32.xlu0 %v420, 120
      %v433 = vpop.permute.xlu0 %432
      %434 = vrot.lane.b32.xlu0 %v421, 120
      %v435 = vpop.permute.xlu0 %434
      %436 = vrot.lane.b32.xlu0 %v422, 120
      %v437 = vpop.permute.xlu0 %436
      %438 = vrot.lane.b32.xlu0 %v423, 120
      %v439 = vpop.permute.xlu0 %438
      %v444 = vadd.f32 %v420, %v433
      %v445 = vadd.f32 %v421, %v435
      %v446 = vadd.f32 %v422, %v437
      %v447 = vadd.f32 %v423, %v439
      %v448 = vmul.f32 %v444, 0.5
      %v449 = vmul.f32 %v445, 0.5
      %v450 = vmul.f32 %v446, 0.5
      %v451 = vmul.f32 %v447, 0.5
      %v456 = vperm.slane %v448, 0
      %v457 = vperm.slane %v449, 0
      %v458 = vperm.slane %v450, 0
      %v459 = vperm.slane %v451, 0
      %460 = vrot.lane.b32.xlu0 %v456, 120
      %v461 = vpop.permute.xlu0 %460
      %462 = vrot.lane.b32.xlu0 %v457, 120
      %v463 = vpop.permute.xlu0 %462
      %464 = vrot.lane.b32.xlu0 %v458, 120
      %v465 = vpop.permute.xlu0 %464
      %466 = vrot.lane.b32.xlu0 %v459, 120
      %v467 = vpop.permute.xlu0 %466
      %vm472 = vcmask 122944
      %473 = vst.msk [vmem:[%s246] sm:$0x1] %vm472, %v461
      %474 = vst.msk [vmem:[%s246 + $0x1] sm:$0x1] %vm472, %v463
      %475 = vst.msk [vmem:[%s246 + $0x2] sm:$0x1] %vm472, %v465
      %476 = vst.msk [vmem:[%s246 + $0x3] sm:$0x1] %vm472, %v467
      %477 = vrot.lane.b32.xlu0 %v420, 8
      %v478 = vpop.permute.xlu0 %477
      %479 = vrot.lane.b32.xlu0 %v421, 8
      %v480 = vpop.permute.xlu0 %479
      %481 = vrot.lane.b32.xlu0 %v422, 8
      %v482 = vpop.permute.xlu0 %481
      %483 = vrot.lane.b32.xlu0 %v423, 8
      %v484 = vpop.permute.xlu0 %483
      %v489 = vsub.f32 %v420, %v478
      %v490 = vsub.f32 %v421, %v480
      %v491 = vsub.f32 %v422, %v482
      %v492 = vsub.f32 %v423, %v484
      %v493 = vmul.f32 %v489, 0.5
      %v494 = vmul.f32 %v490, 0.5
      %v495 = vmul.f32 %v491, 0.5
      %v496 = vmul.f32 %v492, 0.5
      %v501 = vperm.slane %v493, 0
      %v502 = vperm.slane %v494, 0
      %v503 = vperm.slane %v495, 0
      %v504 = vperm.slane %v496, 0
      %505 = vrot.lane.b32.xlu0 %v501, 112
      %v506 = vpop.permute.xlu0 %505
      %507 = vrot.lane.b32.xlu0 %v502, 112
      %v508 = vpop.permute.xlu0 %507
      %509 = vrot.lane.b32.xlu0 %v503, 112
      %v510 = vpop.permute.xlu0 %509
      %511 = vrot.lane.b32.xlu0 %v504, 112
      %v512 = vpop.permute.xlu0 %511
      %517 = vst.msk [vmem:[%s333] sm:$0x1] %vm472, %v506
      %518 = vst.msk [vmem:[%s333 + $0x1] sm:$0x1] %vm472, %v508
      %519 = vst.msk [vmem:[%s333 + $0x2] sm:$0x1] %vm472, %v510
      %520 = vst.msk [vmem:[%s333 + $0x3] sm:$0x1] %vm472, %v512
      %525 = vrot.lane.b32.xlu0 %v424, 120
      %v526 = vpop.permute.xlu0 %525
      %527 = vrot.lane.b32.xlu0 %v425, 120
      %v528 = vpop.permute.xlu0 %527
      %529 = vrot.lane.b32.xlu0 %v426, 120
      %v530 = vpop.permute.xlu0 %529
      %531 = vrot.lane.b32.xlu0 %v427, 120
      %v532 = vpop.permute.xlu0 %531
      %v537 = vadd.f32 %v424, %v526
      %v538 = vadd.f32 %v425, %v528
      %v539 = vadd.f32 %v426, %v530
      %v540 = vadd.f32 %v427, %v532
      %v541 = vmul.f32 %v537, 0.5
      %v542 = vmul.f32 %v538, 0.5
      %v543 = vmul.f32 %v539, 0.5
      %v544 = vmul.f32 %v540, 0.5
      %v549 = vperm.slane %v541, 0
      %v550 = vperm.slane %v542, 0
      %v551 = vperm.slane %v543, 0
      %v552 = vperm.slane %v544, 0
      %553 = vrot.lane.b32.xlu0 %v549, 120
      %v554 = vpop.permute.xlu0 %553
      %555 = vrot.lane.b32.xlu0 %v550, 120
      %v556 = vpop.permute.xlu0 %555
      %557 = vrot.lane.b32.xlu0 %v551, 120
      %v558 = vpop.permute.xlu0 %557
      %559 = vrot.lane.b32.xlu0 %v552, 120
      %v560 = vpop.permute.xlu0 %559
      %565 = vst.msk [vmem:[%s362] sm:$0x1] %vm472, %v554
      %566 = vst.msk [vmem:[%s362 + $0x1] sm:$0x1] %vm472, %v556
      %567 = vst.msk [vmem:[%s362 + $0x2] sm:$0x1] %vm472, %v558
      %568 = vst.msk [vmem:[%s362 + $0x3] sm:$0x1] %vm472, %v560
      %569 = vrot.lane.b32.xlu0 %v424, 8
      %v570 = vpop.permute.xlu0 %569
      %571 = vrot.lane.b32.xlu0 %v425, 8
      %v572 = vpop.permute.xlu0 %571
      %573 = vrot.lane.b32.xlu0 %v426, 8
      %v574 = vpop.permute.xlu0 %573
      %575 = vrot.lane.b32.xlu0 %v427, 8
      %v576 = vpop.permute.xlu0 %575
      %v581 = vsub.f32 %v424, %v570
      %v582 = vsub.f32 %v425, %v572
      %v583 = vsub.f32 %v426, %v574
      %v584 = vsub.f32 %v427, %v576
      %v585 = vmul.f32 %v581, 0.5
      %v586 = vmul.f32 %v582, 0.5
      %v587 = vmul.f32 %v583, 0.5
      %v588 = vmul.f32 %v584, 0.5
      %v593 = vperm.slane %v585, 0
      %v594 = vperm.slane %v586, 0
      %v595 = vperm.slane %v587, 0
      %v596 = vperm.slane %v588, 0
      %597 = vrot.lane.b32.xlu0 %v593, 112
      %v598 = vpop.permute.xlu0 %597
      %599 = vrot.lane.b32.xlu0 %v594, 112
      %v600 = vpop.permute.xlu0 %599
      %601 = vrot.lane.b32.xlu0 %v595, 112
      %v602 = vpop.permute.xlu0 %601
      %603 = vrot.lane.b32.xlu0 %v596, 112
      %v604 = vpop.permute.xlu0 %603
      %609 = vst.msk [vmem:[%s407] sm:$0x1] %vm472, %v598
      %610 = vst.msk [vmem:[%s407 + $0x1] sm:$0x1] %vm472, %v600
      %611 = vst.msk [vmem:[%s407 + $0x2] sm:$0x1] %vm472, %v602
      %612 = vst.msk [vmem:[%s407 + $0x3] sm:$0x1] %vm472, %v604
      %v613 = vld [vmem:[%s222] sm:$0x1]
      %v614 = vld [vmem:[%s222 + $0x1] sm:$0x1]
      %v615 = vld [vmem:[%s222 + $0x2] sm:$0x1]
      %v616 = vld [vmem:[%s222 + $0x3] sm:$0x1]
      %v617 = vld [vmem:[%s234] sm:$0x1]
      %v618 = vld [vmem:[%s234 + $0x1] sm:$0x1]
      %v619 = vld [vmem:[%s234 + $0x2] sm:$0x1]
      %v620 = vld [vmem:[%s234 + $0x3] sm:$0x1]
      %v621 = vadd.f32 %v613, %v617
      %v622 = vadd.f32 %v614, %v618
      %v623 = vadd.f32 %v615, %v619
      %v624 = vadd.f32 %v616, %v620
      %v625 = vsub.f32 %v617, %v613
      %v626 = vsub.f32 %v618, %v614
      %v627 = vsub.f32 %v619, %v615
      %v628 = vsub.f32 %v620, %v616
      %633 = vrot.lane.b32.xlu0 %v621, 120
      %v634 = vpop.permute.xlu0 %633
      %635 = vrot.lane.b32.xlu0 %v622, 120
      %v636 = vpop.permute.xlu0 %635
      %637 = vrot.lane.b32.xlu0 %v623, 120
      %v638 = vpop.permute.xlu0 %637
      %639 = vrot.lane.b32.xlu0 %v624, 120
      %v640 = vpop.permute.xlu0 %639
      %v645 = vadd.f32 %v621, %v634
      %v646 = vadd.f32 %v622, %v636
      %v647 = vadd.f32 %v623, %v638
      %v648 = vadd.f32 %v624, %v640
      %v649 = vmul.f32 %v645, 0.5
      %v650 = vmul.f32 %v646, 0.5
      %v651 = vmul.f32 %v647, 0.5
      %v652 = vmul.f32 %v648, 0.5
      %v657 = vperm.slane %v649, 0
      %v658 = vperm.slane %v650, 0
      %v659 = vperm.slane %v651, 0
      %v660 = vperm.slane %v652, 0
      %661 = vrot.lane.b32.xlu0 %v657, 112
      %v662 = vpop.permute.xlu0 %661
      %663 = vrot.lane.b32.xlu0 %v658, 112
      %v664 = vpop.permute.xlu0 %663
      %665 = vrot.lane.b32.xlu0 %v659, 112
      %v666 = vpop.permute.xlu0 %665
      %667 = vrot.lane.b32.xlu0 %v660, 112
      %v668 = vpop.permute.xlu0 %667
      %vm673 = vcmask 188544
      %674 = vst.msk [vmem:[%s246] sm:$0x1] %vm673, %v662
      %675 = vst.msk [vmem:[%s246 + $0x1] sm:$0x1] %vm673, %v664
      %676 = vst.msk [vmem:[%s246 + $0x2] sm:$0x1] %vm673, %v666
      %677 = vst.msk [vmem:[%s246 + $0x3] sm:$0x1] %vm673, %v668
      %678 = vrot.lane.b32.xlu0 %v621, 8
      %v679 = vpop.permute.xlu0 %678
      %680 = vrot.lane.b32.xlu0 %v622, 8
      %v681 = vpop.permute.xlu0 %680
      %682 = vrot.lane.b32.xlu0 %v623, 8
      %v683 = vpop.permute.xlu0 %682
      %684 = vrot.lane.b32.xlu0 %v624, 8
      %v685 = vpop.permute.xlu0 %684
      %v690 = vsub.f32 %v621, %v679
      %v691 = vsub.f32 %v622, %v681
      %v692 = vsub.f32 %v623, %v683
      %v693 = vsub.f32 %v624, %v685
      %v694 = vmul.f32 %v690, 0.5
      %v695 = vmul.f32 %v691, 0.5
      %v696 = vmul.f32 %v692, 0.5
      %v697 = vmul.f32 %v693, 0.5
      %v702 = vperm.slane %v694, 0
      %v703 = vperm.slane %v695, 0
      %v704 = vperm.slane %v696, 0
      %v705 = vperm.slane %v697, 0
      %706 = vrot.lane.b32.xlu0 %v702, 104
      %v707 = vpop.permute.xlu0 %706
      %708 = vrot.lane.b32.xlu0 %v703, 104
      %v709 = vpop.permute.xlu0 %708
      %710 = vrot.lane.b32.xlu0 %v704, 104
      %v711 = vpop.permute.xlu0 %710
      %712 = vrot.lane.b32.xlu0 %v705, 104
      %v713 = vpop.permute.xlu0 %712
      %718 = vst.msk [vmem:[%s333] sm:$0x1] %vm673, %v707
      %719 = vst.msk [vmem:[%s333 + $0x1] sm:$0x1] %vm673, %v709
      %720 = vst.msk [vmem:[%s333 + $0x2] sm:$0x1] %vm673, %v711
      %721 = vst.msk [vmem:[%s333 + $0x3] sm:$0x1] %vm673, %v713
      %726 = vrot.lane.b32.xlu0 %v625, 120
      %v727 = vpop.permute.xlu0 %726
      %728 = vrot.lane.b32.xlu0 %v626, 120
      %v729 = vpop.permute.xlu0 %728
      %730 = vrot.lane.b32.xlu0 %v627, 120
      %v731 = vpop.permute.xlu0 %730
      %732 = vrot.lane.b32.xlu0 %v628, 120
      %v733 = vpop.permute.xlu0 %732
      %v738 = vadd.f32 %v625, %v727
      %v739 = vadd.f32 %v626, %v729
      %v740 = vadd.f32 %v627, %v731
      %v741 = vadd.f32 %v628, %v733
      %v742 = vmul.f32 %v738, 0.5
      %v743 = vmul.f32 %v739, 0.5
      %v744 = vmul.f32 %v740, 0.5
      %v745 = vmul.f32 %v741, 0.5
      %v750 = vperm.slane %v742, 0
      %v751 = vperm.slane %v743, 0
      %v752 = vperm.slane %v744, 0
      %v753 = vperm.slane %v745, 0
      %754 = vrot.lane.b32.xlu0 %v750, 112
      %v755 = vpop.permute.xlu0 %754
      %756 = vrot.lane.b32.xlu0 %v751, 112
      %v757 = vpop.permute.xlu0 %756
      %758 = vrot.lane.b32.xlu0 %v752, 112
      %v759 = vpop.permute.xlu0 %758
      %760 = vrot.lane.b32.xlu0 %v753, 112
      %v761 = vpop.permute.xlu0 %760
      %766 = vst.msk [vmem:[%s362] sm:$0x1] %vm673, %v755
      %767 = vst.msk [vmem:[%s362 + $0x1] sm:$0x1] %vm673, %v757
      %768 = vst.msk [vmem:[%s362 + $0x2] sm:$0x1] %vm673, %v759
      %769 = vst.msk [vmem:[%s362 + $0x3] sm:$0x1] %vm673, %v761
      %770 = vrot.lane.b32.xlu0 %v625, 8
      %v771 = vpop.permute.xlu0 %770
      %772 = vrot.lane.b32.xlu0 %v626, 8
      %v773 = vpop.permute.xlu0 %772
      %774 = vrot.lane.b32.xlu0 %v627, 8
      %v775 = vpop.permute.xlu0 %774
      %776 = vrot.lane.b32.xlu0 %v628, 8
      %v777 = vpop.permute.xlu0 %776
      %v782 = vsub.f32 %v625, %v771
      %v783 = vsub.f32 %v626, %v773
      %v784 = vsub.f32 %v627, %v775
      %v785 = vsub.f32 %v628, %v777
      %v786 = vmul.f32 %v782, 0.5
      %v787 = vmul.f32 %v783, 0.5
      %v788 = vmul.f32 %v784, 0.5
      %v789 = vmul.f32 %v785, 0.5
      %v794 = vperm.slane %v786, 0
      %v795 = vperm.slane %v787, 0
      %v796 = vperm.slane %v788, 0
      %v797 = vperm.slane %v789, 0
      %798 = vrot.lane.b32.xlu0 %v794, 104
      %v799 = vpop.permute.xlu0 %798
      %800 = vrot.lane.b32.xlu0 %v795, 104
      %v801 = vpop.permute.xlu0 %800
      %802 = vrot.lane.b32.xlu0 %v796, 104
      %v803 = vpop.permute.xlu0 %802
      %804 = vrot.lane.b32.xlu0 %v797, 104
      %v805 = vpop.permute.xlu0 %804
      %810 = vst.msk [vmem:[%s407] sm:$0x1] %vm673, %v799
      %811 = vst.msk [vmem:[%s407 + $0x1] sm:$0x1] %vm673, %v801
      %812 = vst.msk [vmem:[%s407 + $0x2] sm:$0x1] %vm673, %v803
      %813 = vst.msk [vmem:[%s407 + $0x3] sm:$0x1] %vm673, %v805
      %v814 = vld [vmem:[%s222] sm:$0x1]
      %v815 = vld [vmem:[%s222 + $0x1] sm:$0x1]
      %v816 = vld [vmem:[%s222 + $0x2] sm:$0x1]
      %v817 = vld [vmem:[%s222 + $0x3] sm:$0x1]
      %v818 = vld [vmem:[%s234] sm:$0x1]
      %v819 = vld [vmem:[%s234 + $0x1] sm:$0x1]
      %v820 = vld [vmem:[%s234 + $0x2] sm:$0x1]
      %v821 = vld [vmem:[%s234 + $0x3] sm:$0x1]
      %v822 = vadd.f32 %v814, %v818
      %v823 = vadd.f32 %v815, %v819
      %v824 = vadd.f32 %v816, %v820
      %v825 = vadd.f32 %v817, %v821
      %v826 = vsub.f32 %v818, %v814
      %v827 = vsub.f32 %v819, %v815
      %v828 = vsub.f32 %v820, %v816
      %v829 = vsub.f32 %v821, %v817
      %834 = vrot.lane.b32.xlu0 %v822, 120
      %v835 = vpop.permute.xlu0 %834
      %836 = vrot.lane.b32.xlu0 %v823, 120
      %v837 = vpop.permute.xlu0 %836
      %838 = vrot.lane.b32.xlu0 %v824, 120
      %v839 = vpop.permute.xlu0 %838
      %840 = vrot.lane.b32.xlu0 %v825, 120
      %v841 = vpop.permute.xlu0 %840
      %v846 = vadd.f32 %v822, %v835
      %v847 = vadd.f32 %v823, %v837
      %v848 = vadd.f32 %v824, %v839
      %v849 = vadd.f32 %v825, %v841
      %v850 = vmul.f32 %v846, 0.5
      %v851 = vmul.f32 %v847, 0.5
      %v852 = vmul.f32 %v848, 0.5
      %v853 = vmul.f32 %v849, 0.5
      %v858 = vperm.slane %v850, 0
      %v859 = vperm.slane %v851, 0
      %v860 = vperm.slane %v852, 0
      %v861 = vperm.slane %v853, 0
      %862 = vrot.lane.b32.xlu0 %v858, 104
      %v863 = vpop.permute.xlu0 %862
      %864 = vrot.lane.b32.xlu0 %v859, 104
      %v865 = vpop.permute.xlu0 %864
      %866 = vrot.lane.b32.xlu0 %v860, 104
      %v867 = vpop.permute.xlu0 %866
      %868 = vrot.lane.b32.xlu0 %v861, 104
      %v869 = vpop.permute.xlu0 %868
      %vm874 = vcmask 254144
      %875 = vst.msk [vmem:[%s246] sm:$0x1] %vm874, %v863
      %876 = vst.msk [vmem:[%s246 + $0x1] sm:$0x1] %vm874, %v865
      %877 = vst.msk [vmem:[%s246 + $0x2] sm:$0x1] %vm874, %v867
      %878 = vst.msk [vmem:[%s246 + $0x3] sm:$0x1] %vm874, %v869
      %879 = vrot.lane.b32.xlu0 %v822, 8
      %v880 = vpop.permute.xlu0 %879
      %881 = vrot.lane.b32.xlu0 %v823, 8
      %v882 = vpop.permute.xlu0 %881
      %883 = vrot.lane.b32.xlu0 %v824, 8
      %v884 = vpop.permute.xlu0 %883
      %885 = vrot.lane.b32.xlu0 %v825, 8
      %v886 = vpop.permute.xlu0 %885
      %v891 = vsub.f32 %v822, %v880
      %v892 = vsub.f32 %v823, %v882
      %v893 = vsub.f32 %v824, %v884
      %v894 = vsub.f32 %v825, %v886
      %v895 = vmul.f32 %v891, 0.5
      %v896 = vmul.f32 %v892, 0.5
      %v897 = vmul.f32 %v893, 0.5
      %v898 = vmul.f32 %v894, 0.5
      %v903 = vperm.slane %v895, 0
      %v904 = vperm.slane %v896, 0
      %v905 = vperm.slane %v897, 0
      %v906 = vperm.slane %v898, 0
      %907 = vrot.lane.b32.xlu0 %v903, 96
      %v908 = vpop.permute.xlu0 %907
      %909 = vrot.lane.b32.xlu0 %v904, 96
      %v910 = vpop.permute.xlu0 %909
      %911 = vrot.lane.b32.xlu0 %v905, 96
      %v912 = vpop.permute.xlu0 %911
      %913 = vrot.lane.b32.xlu0 %v906, 96
      %v914 = vpop.permute.xlu0 %913
      %919 = vst.msk [vmem:[%s333] sm:$0x1] %vm874, %v908
      %920 = vst.msk [vmem:[%s333 + $0x1] sm:$0x1] %vm874, %v910
      %921 = vst.msk [vmem:[%s333 + $0x2] sm:$0x1] %vm874, %v912
      %922 = vst.msk [vmem:[%s333 + $0x3] sm:$0x1] %vm874, %v914
      %927 = vrot.lane.b32.xlu0 %v826, 120
      %v928 = vpop.permute.xlu0 %927
      %929 = vrot.lane.b32.xlu0 %v827, 120
      %v930 = vpop.permute.xlu0 %929
      %931 = vrot.lane.b32.xlu0 %v828, 120
      %v932 = vpop.permute.xlu0 %931
      %933 = vrot.lane.b32.xlu0 %v829, 120
      %v934 = vpop.permute.xlu0 %933
      %v939 = vadd.f32 %v826, %v928
      %v940 = vadd.f32 %v827, %v930
      %v941 = vadd.f32 %v828, %v932
      %v942 = vadd.f32 %v829, %v934
      %v943 = vmul.f32 %v939, 0.5
      %v944 = vmul.f32 %v940, 0.5
      %v945 = vmul.f32 %v941, 0.5
      %v946 = vmul.f32 %v942, 0.5
      %v951 = vperm.slane %v943, 0
      %v952 = vperm.slane %v944, 0
      %v953 = vperm.slane %v945, 0
      %v954 = vperm.slane %v946, 0
      %955 = vrot.lane.b32.xlu0 %v951, 104
      %v956 = vpop.permute.xlu0 %955
      %957 = vrot.lane.b32.xlu0 %v952, 104
      %v958 = vpop.permute.xlu0 %957
      %959 = vrot.lane.b32.xlu0 %v953, 104
      %v960 = vpop.permute.xlu0 %959
      %961 = vrot.lane.b32.xlu0 %v954, 104
      %v962 = vpop.permute.xlu0 %961
      %967 = vst.msk [vmem:[%s362] sm:$0x1] %vm874, %v956
      %968 = vst.msk [vmem:[%s362 + $0x1] sm:$0x1] %vm874, %v958
      %969 = vst.msk [vmem:[%s362 + $0x2] sm:$0x1] %vm874, %v960
      %970 = vst.msk [vmem:[%s362 + $0x3] sm:$0x1] %vm874, %v962
      %971 = vrot.lane.b32.xlu0 %v826, 8
      %v972 = vpop.permute.xlu0 %971
      %973 = vrot.lane.b32.xlu0 %v827, 8
      %v974 = vpop.permute.xlu0 %973
      %975 = vrot.lane.b32.xlu0 %v828, 8
      %v976 = vpop.permute.xlu0 %975
      %977 = vrot.lane.b32.xlu0 %v829, 8
      %v978 = vpop.permute.xlu0 %977
      %v983 = vsub.f32 %v826, %v972
      %v984 = vsub.f32 %v827, %v974
      %v985 = vsub.f32 %v828, %v976
      %v986 = vsub.f32 %v829, %v978
      %v987 = vmul.f32 %v983, 0.5
      %v988 = vmul.f32 %v984, 0.5
      %v989 = vmul.f32 %v985, 0.5
      %v990 = vmul.f32 %v986, 0.5
      %v995 = vperm.slane %v987, 0
      %v996 = vperm.slane %v988, 0
      %v997 = vperm.slane %v989, 0
      %v998 = vperm.slane %v990, 0
      %999 = vrot.lane.b32.xlu0 %v995, 96
      %v1000 = vpop.permute.xlu0 %999
      %1001 = vrot.lane.b32.xlu0 %v996, 96
      %v1002 = vpop.permute.xlu0 %1001
      %1003 = vrot.lane.b32.xlu0 %v997, 96
      %v1004 = vpop.permute.xlu0 %1003
      %1005 = vrot.lane.b32.xlu0 %v998, 96
      %v1006 = vpop.permute.xlu0 %1005
      %1011 = vst.msk [vmem:[%s407] sm:$0x1] %vm874, %v1000
      %1012 = vst.msk [vmem:[%s407 + $0x1] sm:$0x1] %vm874, %v1002
      %1013 = vst.msk [vmem:[%s407 + $0x2] sm:$0x1] %vm874, %v1004
      %1014 = vst.msk [vmem:[%s407 + $0x3] sm:$0x1] %vm874, %v1006
      %v1015 = vld [vmem:[%s222] sm:$0x1]
      %v1016 = vld [vmem:[%s222 + $0x1] sm:$0x1]
      %v1017 = vld [vmem:[%s222 + $0x2] sm:$0x1]
      %v1018 = vld [vmem:[%s222 + $0x3] sm:$0x1]
      %v1019 = vld [vmem:[%s234] sm:$0x1]
      %v1020 = vld [vmem:[%s234 + $0x1] sm:$0x1]
      %v1021 = vld [vmem:[%s234 + $0x2] sm:$0x1]
      %v1022 = vld [vmem:[%s234 + $0x3] sm:$0x1]
      %v1023 = vadd.f32 %v1015, %v1019
      %v1024 = vadd.f32 %v1016, %v1020
      %v1025 = vadd.f32 %v1017, %v1021
      %v1026 = vadd.f32 %v1018, %v1022
      %v1027 = vsub.f32 %v1019, %v1015
      %v1028 = vsub.f32 %v1020, %v1016
      %v1029 = vsub.f32 %v1021, %v1017
      %v1030 = vsub.f32 %v1022, %v1018
      %1035 = vrot.lane.b32.xlu0 %v1023, 120
      %v1036 = vpop.permute.xlu0 %1035
      %1037 = vrot.lane.b32.xlu0 %v1024, 120
      %v1038 = vpop.permute.xlu0 %1037
      %1039 = vrot.lane.b32.xlu0 %v1025, 120
      %v1040 = vpop.permute.xlu0 %1039
      %1041 = vrot.lane.b32.xlu0 %v1026, 120
      %v1042 = vpop.permute.xlu0 %1041
      %v1047 = vadd.f32 %v1023, %v1036
      %v1048 = vadd.f32 %v1024, %v1038
      %v1049 = vadd.f32 %v1025, %v1040
      %v1050 = vadd.f32 %v1026, %v1042
      %v1051 = vmul.f32 %v1047, 0.5
      %v1052 = vmul.f32 %v1048, 0.5
      %v1053 = vmul.f32 %v1049, 0.5
      %v1054 = vmul.f32 %v1050, 0.5
      %v1059 = vperm.slane %v1051, 0
      %v1060 = vperm.slane %v1052, 0
      %v1061 = vperm.slane %v1053, 0
      %v1062 = vperm.slane %v1054, 0
      %1063 = vrot.lane.b32.xlu0 %v1059, 96
      %v1064 = vpop.permute.xlu0 %1063
      %1065 = vrot.lane.b32.xlu0 %v1060, 96
      %v1066 = vpop.permute.xlu0 %1065
      %1067 = vrot.lane.b32.xlu0 %v1061, 96
      %v1068 = vpop.permute.xlu0 %1067
      %1069 = vrot.lane.b32.xlu0 %v1062, 96
      %v1070 = vpop.permute.xlu0 %1069
      %vm1075 = vcmask 319744
      %1076 = vst.msk [vmem:[%s246] sm:$0x1] %vm1075, %v1064
      %1077 = vst.msk [vmem:[%s246 + $0x1] sm:$0x1] %vm1075, %v1066
      %1078 = vst.msk [vmem:[%s246 + $0x2] sm:$0x1] %vm1075, %v1068
      %1079 = vst.msk [vmem:[%s246 + $0x3] sm:$0x1] %vm1075, %v1070
      %1080 = vrot.lane.b32.xlu0 %v1023, 8
      %v1081 = vpop.permute.xlu0 %1080
      %1082 = vrot.lane.b32.xlu0 %v1024, 8
      %v1083 = vpop.permute.xlu0 %1082
      %1084 = vrot.lane.b32.xlu0 %v1025, 8
      %v1085 = vpop.permute.xlu0 %1084
      %1086 = vrot.lane.b32.xlu0 %v1026, 8
      %v1087 = vpop.permute.xlu0 %1086
      %v1092 = vsub.f32 %v1023, %v1081
      %v1093 = vsub.f32 %v1024, %v1083
      %v1094 = vsub.f32 %v1025, %v1085
      %v1095 = vsub.f32 %v1026, %v1087
      %v1096 = vmul.f32 %v1092, 0.5
      %v1097 = vmul.f32 %v1093, 0.5
      %v1098 = vmul.f32 %v1094, 0.5
      %v1099 = vmul.f32 %v1095, 0.5
      %v1104 = vperm.slane %v1096, 0
      %v1105 = vperm.slane %v1097, 0
      %v1106 = vperm.slane %v1098, 0
      %v1107 = vperm.slane %v1099, 0
      %1108 = vrot.lane.b32.xlu0 %v1104, 88
      %v1109 = vpop.permute.xlu0 %1108
      %1110 = vrot.lane.b32.xlu0 %v1105, 88
      %v1111 = vpop.permute.xlu0 %1110
      %1112 = vrot.lane.b32.xlu0 %v1106, 88
      %v1113 = vpop.permute.xlu0 %1112
      %1114 = vrot.lane.b32.xlu0 %v1107, 88
      %v1115 = vpop.permute.xlu0 %1114
      %1120 = vst.msk [vmem:[%s333] sm:$0x1] %vm1075, %v1109
      %1121 = vst.msk [vmem:[%s333 + $0x1] sm:$0x1] %vm1075, %v1111
      %1122 = vst.msk [vmem:[%s333 + $0x2] sm:$0x1] %vm1075, %v1113
      %1123 = vst.msk [vmem:[%s333 + $0x3] sm:$0x1] %vm1075, %v1115
      %1128 = vrot.lane.b32.xlu0 %v1027, 120
      %v1129 = vpop.permute.xlu0 %1128
      %1130 = vrot.lane.b32.xlu0 %v1028, 120
      %v1131 = vpop.permute.xlu0 %1130
      %1132 = vrot.lane.b32.xlu0 %v1029, 120
      %v1133 = vpop.permute.xlu0 %1132
      %1134 = vrot.lane.b32.xlu0 %v1030, 120
      %v1135 = vpop.permute.xlu0 %1134
      %v1140 = vadd.f32 %v1027, %v1129
      %v1141 = vadd.f32 %v1028, %v1131
      %v1142 = vadd.f32 %v1029, %v1133
      %v1143 = vadd.f32 %v1030, %v1135
      %v1144 = vmul.f32 %v1140, 0.5
      %v1145 = vmul.f32 %v1141, 0.5
      %v1146 = vmul.f32 %v1142, 0.5
      %v1147 = vmul.f32 %v1143, 0.5
      %v1152 = vperm.slane %v1144, 0
      %v1153 = vperm.slane %v1145, 0
      %v1154 = vperm.slane %v1146, 0
      %v1155 = vperm.slane %v1147, 0
      %1156 = vrot.lane.b32.xlu0 %v1152, 96
      %v1157 = vpop.permute.xlu0 %1156
      %1158 = vrot.lane.b32.xlu0 %v1153, 96
      %v1159 = vpop.permute.xlu0 %1158
      %1160 = vrot.lane.b32.xlu0 %v1154, 96
      %v1161 = vpop.permute.xlu0 %1160
      %1162 = vrot.lane.b32.xlu0 %v1155, 96
      %v1163 = vpop.permute.xlu0 %1162
      %1168 = vst.msk [vmem:[%s362] sm:$0x1] %vm1075, %v1157
      %1169 = vst.msk [vmem:[%s362 + $0x1] sm:$0x1] %vm1075, %v1159
      %1170 = vst.msk [vmem:[%s362 + $0x2] sm:$0x1] %vm1075, %v1161
      %1171 = vst.msk [vmem:[%s362 + $0x3] sm:$0x1] %vm1075, %v1163
      %1172 = vrot.lane.b32.xlu0 %v1027, 8
      %v1173 = vpop.permute.xlu0 %1172
      %1174 = vrot.lane.b32.xlu0 %v1028, 8
      %v1175 = vpop.permute.xlu0 %1174
      %1176 = vrot.lane.b32.xlu0 %v1029, 8
      %v1177 = vpop.permute.xlu0 %1176
      %1178 = vrot.lane.b32.xlu0 %v1030, 8
      %v1179 = vpop.permute.xlu0 %1178
      %v1184 = vsub.f32 %v1027, %v1173
      %v1185 = vsub.f32 %v1028, %v1175
      %v1186 = vsub.f32 %v1029, %v1177
      %v1187 = vsub.f32 %v1030, %v1179
      %v1188 = vmul.f32 %v1184, 0.5
      %v1189 = vmul.f32 %v1185, 0.5
      %v1190 = vmul.f32 %v1186, 0.5
      %v1191 = vmul.f32 %v1187, 0.5
      %v1196 = vperm.slane %v1188, 0
      %v1197 = vperm.slane %v1189, 0
      %v1198 = vperm.slane %v1190, 0
      %v1199 = vperm.slane %v1191, 0
      %1200 = vrot.lane.b32.xlu0 %v1196, 88
      %v1201 = vpop.permute.xlu0 %1200
      %1202 = vrot.lane.b32.xlu0 %v1197, 88
      %v1203 = vpop.permute.xlu0 %1202
      %1204 = vrot.lane.b32.xlu0 %v1198, 88
      %v1205 = vpop.permute.xlu0 %1204
      %1206 = vrot.lane.b32.xlu0 %v1199, 88
      %v1207 = vpop.permute.xlu0 %1206
      %1212 = vst.msk [vmem:[%s407] sm:$0x1] %vm1075, %v1201
      %1213 = vst.msk [vmem:[%s407 + $0x1] sm:$0x1] %vm1075, %v1203
      %1214 = vst.msk [vmem:[%s407 + $0x2] sm:$0x1] %vm1075, %v1205
      %1215 = vst.msk [vmem:[%s407 + $0x3] sm:$0x1] %vm1075, %v1207
      %v1216 = vld [vmem:[%s222] sm:$0x1]
      %v1217 = vld [vmem:[%s222 + $0x1] sm:$0x1]
      %v1218 = vld [vmem:[%s222 + $0x2] sm:$0x1]
      %v1219 = vld [vmem:[%s222 + $0x3] sm:$0x1]
      %v1220 = vld [vmem:[%s234] sm:$0x1]
      %v1221 = vld [vmem:[%s234 + $0x1] sm:$0x1]
      %v1222 = vld [vmem:[%s234 + $0x2] sm:$0x1]
      %v1223 = vld [vmem:[%s234 + $0x3] sm:$0x1]
      %v1224 = vadd.f32 %v1216, %v1220
      %v1225 = vadd.f32 %v1217, %v1221
      %v1226 = vadd.f32 %v1218, %v1222
      %v1227 = vadd.f32 %v1219, %v1223
      %v1228 = vsub.f32 %v1220, %v1216
      %v1229 = vsub.f32 %v1221, %v1217
      %v1230 = vsub.f32 %v1222, %v1218
      %v1231 = vsub.f32 %v1223, %v1219
      %1236 = vrot.lane.b32.xlu0 %v1224, 120
      %v1237 = vpop.permute.xlu0 %1236
      %1238 = vrot.lane.b32.xlu0 %v1225, 120
      %v1239 = vpop.permute.xlu0 %1238
      %1240 = vrot.lane.b32.xlu0 %v1226, 120
      %v1241 = vpop.permute.xlu0 %1240
      %1242 = vrot.lane.b32.xlu0 %v1227, 120
      %v1243 = vpop.permute.xlu0 %1242
      %v1248 = vadd.f32 %v1224, %v1237
      %v1249 = vadd.f32 %v1225, %v1239
      %v1250 = vadd.f32 %v1226, %v1241
      %v1251 = vadd.f32 %v1227, %v1243
      %v1252 = vmul.f32 %v1248, 0.5
      %v1253 = vmul.f32 %v1249, 0.5
      %v1254 = vmul.f32 %v1250, 0.5
      %v1255 = vmul.f32 %v1251, 0.5
      %v1260 = vperm.slane %v1252, 0
      %v1261 = vperm.slane %v1253, 0
      %v1262 = vperm.slane %v1254, 0
      %v1263 = vperm.slane %v1255, 0
      %1264 = vrot.lane.b32.xlu0 %v1260, 88
      %v1265 = vpop.permute.xlu0 %1264
      %1266 = vrot.lane.b32.xlu0 %v1261, 88
      %v1267 = vpop.permute.xlu0 %1266
      %1268 = vrot.lane.b32.xlu0 %v1262, 88
      %v1269 = vpop.permute.xlu0 %1268
      %1270 = vrot.lane.b32.xlu0 %v1263, 88
      %v1271 = vpop.permute.xlu0 %1270
      %vm1276 = vcmask 385344
      %1277 = vst.msk [vmem:[%s246] sm:$0x1] %vm1276, %v1265
      %1278 = vst.msk [vmem:[%s246 + $0x1] sm:$0x1] %vm1276, %v1267
      %1279 = vst.msk [vmem:[%s246 + $0x2] sm:$0x1] %vm1276, %v1269
      %1280 = vst.msk [vmem:[%s246 + $0x3] sm:$0x1] %vm1276, %v1271
      %1281 = vrot.lane.b32.xlu0 %v1224, 8
      %v1282 = vpop.permute.xlu0 %1281
      %1283 = vrot.lane.b32.xlu0 %v1225, 8
      %v1284 = vpop.permute.xlu0 %1283
      %1285 = vrot.lane.b32.xlu0 %v1226, 8
      %v1286 = vpop.permute.xlu0 %1285
      %1287 = vrot.lane.b32.xlu0 %v1227, 8
      %v1288 = vpop.permute.xlu0 %1287
      %v1293 = vsub.f32 %v1224, %v1282
      %v1294 = vsub.f32 %v1225, %v1284
      %v1295 = vsub.f32 %v1226, %v1286
      %v1296 = vsub.f32 %v1227, %v1288
      %v1297 = vmul.f32 %v1293, 0.5
      %v1298 = vmul.f32 %v1294, 0.5
      %v1299 = vmul.f32 %v1295, 0.5
      %v1300 = vmul.f32 %v1296, 0.5
      %v1305 = vperm.slane %v1297, 0
      %v1306 = vperm.slane %v1298, 0
      %v1307 = vperm.slane %v1299, 0
      %v1308 = vperm.slane %v1300, 0
      %1309 = vrot.lane.b32.xlu0 %v1305, 80
      %v1310 = vpop.permute.xlu0 %1309
      %1311 = vrot.lane.b32.xlu0 %v1306, 80
      %v1312 = vpop.permute.xlu0 %1311
      %1313 = vrot.lane.b32.xlu0 %v1307, 80
      %v1314 = vpop.permute.xlu0 %1313
      %1315 = vrot.lane.b32.xlu0 %v1308, 80
      %v1316 = vpop.permute.xlu0 %1315
      %1321 = vst.msk [vmem:[%s333] sm:$0x1] %vm1276, %v1310
      %1322 = vst.msk [vmem:[%s333 + $0x1] sm:$0x1] %vm1276, %v1312
      %1323 = vst.msk [vmem:[%s333 + $0x2] sm:$0x1] %vm1276, %v1314
      %1324 = vst.msk [vmem:[%s333 + $0x3] sm:$0x1] %vm1276, %v1316
      %1329 = vrot.lane.b32.xlu0 %v1228, 120
      %v1330 = vpop.permute.xlu0 %1329
      %1331 = vrot.lane.b32.xlu0 %v1229, 120
      %v1332 = vpop.permute.xlu0 %1331
      %1333 = vrot.lane.b32.xlu0 %v1230, 120
      %v1334 = vpop.permute.xlu0 %1333
      %1335 = vrot.lane.b32.xlu0 %v1231, 120
      %v1336 = vpop.permute.xlu0 %1335
      %v1341 = vadd.f32 %v1228, %v1330
      %v1342 = vadd.f32 %v1229, %v1332
      %v1343 = vadd.f32 %v1230, %v1334
      %v1344 = vadd.f32 %v1231, %v1336
      %v1345 = vmul.f32 %v1341, 0.5
      %v1346 = vmul.f32 %v1342, 0.5
      %v1347 = vmul.f32 %v1343, 0.5
      %v1348 = vmul.f32 %v1344, 0.5
      %v1353 = vperm.slane %v1345, 0
      %v1354 = vperm.slane %v1346, 0
      %v1355 = vperm.slane %v1347, 0
      %v1356 = vperm.slane %v1348, 0
      %1357 = vrot.lane.b32.xlu0 %v1353, 88
      %v1358 = vpop.permute.xlu0 %1357
      %1359 = vrot.lane.b32.xlu0 %v1354, 88
      %v1360 = vpop.permute.xlu0 %1359
      %1361 = vrot.lane.b32.xlu0 %v1355, 88
      %v1362 = vpop.permute.xlu0 %1361
      %1363 = vrot.lane.b32.xlu0 %v1356, 88
      %v1364 = vpop.permute.xlu0 %1363
      %1369 = vst.msk [vmem:[%s362] sm:$0x1] %vm1276, %v1358
      %1370 = vst.msk [vmem:[%s362 + $0x1] sm:$0x1] %vm1276, %v1360
      %1371 = vst.msk [vmem:[%s362 + $0x2] sm:$0x1] %vm1276, %v1362
      %1372 = vst.msk [vmem:[%s362 + $0x3] sm:$0x1] %vm1276, %v1364
      %1373 = vrot.lane.b32.xlu0 %v1228, 8
      %v1374 = vpop.permute.xlu0 %1373
      %1375 = vrot.lane.b32.xlu0 %v1229, 8
      %v1376 = vpop.permute.xlu0 %1375
      %1377 = vrot.lane.b32.xlu0 %v1230, 8
      %v1378 = vpop.permute.xlu0 %1377
      %1379 = vrot.lane.b32.xlu0 %v1231, 8
      %v1380 = vpop.permute.xlu0 %1379
      %v1385 = vsub.f32 %v1228, %v1374
      %v1386 = vsub.f32 %v1229, %v1376
      %v1387 = vsub.f32 %v1230, %v1378
      %v1388 = vsub.f32 %v1231, %v1380
      %v1389 = vmul.f32 %v1385, 0.5
      %v1390 = vmul.f32 %v1386, 0.5
      %v1391 = vmul.f32 %v1387, 0.5
      %v1392 = vmul.f32 %v1388, 0.5
      %v1397 = vperm.slane %v1389, 0
      %v1398 = vperm.slane %v1390, 0
      %v1399 = vperm.slane %v1391, 0
      %v1400 = vperm.slane %v1392, 0
      %1401 = vrot.lane.b32.xlu0 %v1397, 80
      %v1402 = vpop.permute.xlu0 %1401
      %1403 = vrot.lane.b32.xlu0 %v1398, 80
      %v1404 = vpop.permute.xlu0 %1403
      %1405 = vrot.lane.b32.xlu0 %v1399, 80
      %v1406 = vpop.permute.xlu0 %1405
      %1407 = vrot.lane.b32.xlu0 %v1400, 80
      %v1408 = vpop.permute.xlu0 %1407
      %1413 = vst.msk [vmem:[%s407] sm:$0x1] %vm1276, %v1402
      %1414 = vst.msk [vmem:[%s407 + $0x1] sm:$0x1] %vm1276, %v1404
      %1415 = vst.msk [vmem:[%s407 + $0x2] sm:$0x1] %vm1276, %v1406
      %1416 = vst.msk [vmem:[%s407 + $0x3] sm:$0x1] %vm1276, %v1408
      %v1417 = vld [vmem:[%s222] sm:$0x1]
      %v1418 = vld [vmem:[%s222 + $0x1] sm:$0x1]
      %v1419 = vld [vmem:[%s222 + $0x2] sm:$0x1]
      %v1420 = vld [vmem:[%s222 + $0x3] sm:$0x1]
      %v1421 = vld [vmem:[%s234] sm:$0x1]
      %v1422 = vld [vmem:[%s234 + $0x1] sm:$0x1]
      %v1423 = vld [vmem:[%s234 + $0x2] sm:$0x1]
      %v1424 = vld [vmem:[%s234 + $0x3] sm:$0x1]
      %v1425 = vadd.f32 %v1417, %v1421
      %v1426 = vadd.f32 %v1418, %v1422
      %v1427 = vadd.f32 %v1419, %v1423
      %v1428 = vadd.f32 %v1420, %v1424
      %v1429 = vsub.f32 %v1421, %v1417
      %v1430 = vsub.f32 %v1422, %v1418
      %v1431 = vsub.f32 %v1423, %v1419
      %v1432 = vsub.f32 %v1424, %v1420
      %1437 = vrot.lane.b32.xlu0 %v1425, 120
      %v1438 = vpop.permute.xlu0 %1437
      %1439 = vrot.lane.b32.xlu0 %v1426, 120
      %v1440 = vpop.permute.xlu0 %1439
      %1441 = vrot.lane.b32.xlu0 %v1427, 120
      %v1442 = vpop.permute.xlu0 %1441
      %1443 = vrot.lane.b32.xlu0 %v1428, 120
      %v1444 = vpop.permute.xlu0 %1443
      %v1449 = vadd.f32 %v1425, %v1438
      %v1450 = vadd.f32 %v1426, %v1440
      %v1451 = vadd.f32 %v1427, %v1442
      %v1452 = vadd.f32 %v1428, %v1444
      %v1453 = vmul.f32 %v1449, 0.5
      %v1454 = vmul.f32 %v1450, 0.5
      %v1455 = vmul.f32 %v1451, 0.5
      %v1456 = vmul.f32 %v1452, 0.5
      %v1461 = vperm.slane %v1453, 0
      %v1462 = vperm.slane %v1454, 0
      %v1463 = vperm.slane %v1455, 0
      %v1464 = vperm.slane %v1456, 0
      %1465 = vrot.lane.b32.xlu0 %v1461, 80
      %v1466 = vpop.permute.xlu0 %1465
      %1467 = vrot.lane.b32.xlu0 %v1462, 80
      %v1468 = vpop.permute.xlu0 %1467
      %1469 = vrot.lane.b32.xlu0 %v1463, 80
      %v1470 = vpop.permute.xlu0 %1469
      %1471 = vrot.lane.b32.xlu0 %v1464, 80
      %v1472 = vpop.permute.xlu0 %1471
      %vm1477 = vcmask 450944
      %1478 = vst.msk [vmem:[%s246] sm:$0x1] %vm1477, %v1466
      %1479 = vst.msk [vmem:[%s246 + $0x1] sm:$0x1] %vm1477, %v1468
      %1480 = vst.msk [vmem:[%s246 + $0x2] sm:$0x1] %vm1477, %v1470
      %1481 = vst.msk [vmem:[%s246 + $0x3] sm:$0x1] %vm1477, %v1472
      %1482 = vrot.lane.b32.xlu0 %v1425, 8
      %v1483 = vpop.permute.xlu0 %1482
      %1484 = vrot.lane.b32.xlu0 %v1426, 8
      %v1485 = vpop.permute.xlu0 %1484
      %1486 = vrot.lane.b32.xlu0 %v1427, 8
      %v1487 = vpop.permute.xlu0 %1486
      %1488 = vrot.lane.b32.xlu0 %v1428, 8
      %v1489 = vpop.permute.xlu0 %1488
      %v1494 = vsub.f32 %v1425, %v1483
      %v1495 = vsub.f32 %v1426, %v1485
      %v1496 = vsub.f32 %v1427, %v1487
      %v1497 = vsub.f32 %v1428, %v1489
      %v1498 = vmul.f32 %v1494, 0.5
      %v1499 = vmul.f32 %v1495, 0.5
      %v1500 = vmul.f32 %v1496, 0.5
      %v1501 = vmul.f32 %v1497, 0.5
      %v1506 = vperm.slane %v1498, 0
      %v1507 = vperm.slane %v1499, 0
      %v1508 = vperm.slane %v1500, 0
      %v1509 = vperm.slane %v1501, 0
      %1510 = vrot.lane.b32.xlu0 %v1506, 72
      %v1511 = vpop.permute.xlu0 %1510
      %1512 = vrot.lane.b32.xlu0 %v1507, 72
      %v1513 = vpop.permute.xlu0 %1512
      %1514 = vrot.lane.b32.xlu0 %v1508, 72
      %v1515 = vpop.permute.xlu0 %1514
      %1516 = vrot.lane.b32.xlu0 %v1509, 72
      %v1517 = vpop.permute.xlu0 %1516
      %1522 = vst.msk [vmem:[%s333] sm:$0x1] %vm1477, %v1511
      %1523 = vst.msk [vmem:[%s333 + $0x1] sm:$0x1] %vm1477, %v1513
      %1524 = vst.msk [vmem:[%s333 + $0x2] sm:$0x1] %vm1477, %v1515
      %1525 = vst.msk [vmem:[%s333 + $0x3] sm:$0x1] %vm1477, %v1517
      %1530 = vrot.lane.b32.xlu0 %v1429, 120
      %v1531 = vpop.permute.xlu0 %1530
      %1532 = vrot.lane.b32.xlu0 %v1430, 120
      %v1533 = vpop.permute.xlu0 %1532
      %1534 = vrot.lane.b32.xlu0 %v1431, 120
      %v1535 = vpop.permute.xlu0 %1534
      %1536 = vrot.lane.b32.xlu0 %v1432, 120
      %v1537 = vpop.permute.xlu0 %1536
      %v1542 = vadd.f32 %v1429, %v1531
      %v1543 = vadd.f32 %v1430, %v1533
      %v1544 = vadd.f32 %v1431, %v1535
      %v1545 = vadd.f32 %v1432, %v1537
      %v1546 = vmul.f32 %v1542, 0.5
      %v1547 = vmul.f32 %v1543, 0.5
      %v1548 = vmul.f32 %v1544, 0.5
      %v1549 = vmul.f32 %v1545, 0.5
      %v1554 = vperm.slane %v1546, 0
      %v1555 = vperm.slane %v1547, 0
      %v1556 = vperm.slane %v1548, 0
      %v1557 = vperm.slane %v1549, 0
      %1558 = vrot.lane.b32.xlu0 %v1554, 80
      %v1559 = vpop.permute.xlu0 %1558
      %1560 = vrot.lane.b32.xlu0 %v1555, 80
      %v1561 = vpop.permute.xlu0 %1560
      %1562 = vrot.lane.b32.xlu0 %v1556, 80
      %v1563 = vpop.permute.xlu0 %1562
      %1564 = vrot.lane.b32.xlu0 %v1557, 80
      %v1565 = vpop.permute.xlu0 %1564
      %1570 = vst.msk [vmem:[%s362] sm:$0x1] %vm1477, %v1559
      %1571 = vst.msk [vmem:[%s362 + $0x1] sm:$0x1] %vm1477, %v1561
      %1572 = vst.msk [vmem:[%s362 + $0x2] sm:$0x1] %vm1477, %v1563
      %1573 = vst.msk [vmem:[%s362 + $0x3] sm:$0x1] %vm1477, %v1565
      %1574 = vrot.lane.b32.xlu0 %v1429, 8
      %v1575 = vpop.permute.xlu0 %1574
      %1576 = vrot.lane.b32.xlu0 %v1430, 8
      %v1577 = vpop.permute.xlu0 %1576
      %1578 = vrot.lane.b32.xlu0 %v1431, 8
      %v1579 = vpop.permute.xlu0 %1578
      %1580 = vrot.lane.b32.xlu0 %v1432, 8
      %v1581 = vpop.permute.xlu0 %1580
      %v1586 = vsub.f32 %v1429, %v1575
      %v1587 = vsub.f32 %v1430, %v1577
      %v1588 = vsub.f32 %v1431, %v1579
      %v1589 = vsub.f32 %v1432, %v1581
      %v1590 = vmul.f32 %v1586, 0.5
      %v1591 = vmul.f32 %v1587, 0.5
      %v1592 = vmul.f32 %v1588, 0.5
      %v1593 = vmul.f32 %v1589, 0.5
      %v1598 = vperm.slane %v1590, 0
      %v1599 = vperm.slane %v1591, 0
      %v1600 = vperm.slane %v1592, 0
      %v1601 = vperm.slane %v1593, 0
      %1602 = vrot.lane.b32.xlu0 %v1598, 72
      %v1603 = vpop.permute.xlu0 %1602
      %1604 = vrot.lane.b32.xlu0 %v1599, 72
      %v1605 = vpop.permute.xlu0 %1604
      %1606 = vrot.lane.b32.xlu0 %v1600, 72
      %v1607 = vpop.permute.xlu0 %1606
      %1608 = vrot.lane.b32.xlu0 %v1601, 72
      %v1609 = vpop.permute.xlu0 %1608
      %1614 = vst.msk [vmem:[%s407] sm:$0x1] %vm1477, %v1603
      %1615 = vst.msk [vmem:[%s407 + $0x1] sm:$0x1] %vm1477, %v1605
      %1616 = vst.msk [vmem:[%s407 + $0x2] sm:$0x1] %vm1477, %v1607
      %1617 = vst.msk [vmem:[%s407 + $0x3] sm:$0x1] %vm1477, %v1609
      %v1618 = vld [vmem:[%s222] sm:$0x1]
      %v1619 = vld [vmem:[%s222 + $0x1] sm:$0x1]
      %v1620 = vld [vmem:[%s222 + $0x2] sm:$0x1]
      %v1621 = vld [vmem:[%s222 + $0x3] sm:$0x1]
      %v1622 = vld [vmem:[%s234] sm:$0x1]
      %v1623 = vld [vmem:[%s234 + $0x1] sm:$0x1]
      %v1624 = vld [vmem:[%s234 + $0x2] sm:$0x1]
      %v1625 = vld [vmem:[%s234 + $0x3] sm:$0x1]
      %v1626 = vadd.f32 %v1618, %v1622
      %v1627 = vadd.f32 %v1619, %v1623
      %v1628 = vadd.f32 %v1620, %v1624
      %v1629 = vadd.f32 %v1621, %v1625
      %v1630 = vsub.f32 %v1622, %v1618
      %v1631 = vsub.f32 %v1623, %v1619
      %v1632 = vsub.f32 %v1624, %v1620
      %v1633 = vsub.f32 %v1625, %v1621
      %1638 = vrot.lane.b32.xlu0 %v1626, 120
      %v1639 = vpop.permute.xlu0 %1638
      %1640 = vrot.lane.b32.xlu0 %v1627, 120
      %v1641 = vpop.permute.xlu0 %1640
      %1642 = vrot.lane.b32.xlu0 %v1628, 120
      %v1643 = vpop.permute.xlu0 %1642
      %1644 = vrot.lane.b32.xlu0 %v1629, 120
      %v1645 = vpop.permute.xlu0 %1644
      %v1650 = vadd.f32 %v1626, %v1639
      %v1651 = vadd.f32 %v1627, %v1641
      %v1652 = vadd.f32 %v1628, %v1643
      %v1653 = vadd.f32 %v1629, %v1645
      %v1654 = vmul.f32 %v1650, 0.5
      %v1655 = vmul.f32 %v1651, 0.5
      %v1656 = vmul.f32 %v1652, 0.5
      %v1657 = vmul.f32 %v1653, 0.5
      %v1662 = vperm.slane %v1654, 0
      %v1663 = vperm.slane %v1655, 0
      %v1664 = vperm.slane %v1656, 0
      %v1665 = vperm.slane %v1657, 0
      %1666 = vrot.lane.b32.xlu0 %v1662, 72
      %v1667 = vpop.permute.xlu0 %1666
      %1668 = vrot.lane.b32.xlu0 %v1663, 72
      %v1669 = vpop.permute.xlu0 %1668
      %1670 = vrot.lane.b32.xlu0 %v1664, 72
      %v1671 = vpop.permute.xlu0 %1670
      %1672 = vrot.lane.b32.xlu0 %v1665, 72
      %v1673 = vpop.permute.xlu0 %1672
      %vm1678 = vcmask 516544
      %1679 = vst.msk [vmem:[%s246] sm:$0x1] %vm1678, %v1667
      %1680 = vst.msk [vmem:[%s246 + $0x1] sm:$0x1] %vm1678, %v1669
      %1681 = vst.msk [vmem:[%s246 + $0x2] sm:$0x1] %vm1678, %v1671
      %1682 = vst.msk [vmem:[%s246 + $0x3] sm:$0x1] %vm1678, %v1673
      %1683 = vrot.lane.b32.xlu0 %v1626, 8
      %v1684 = vpop.permute.xlu0 %1683
      %1685 = vrot.lane.b32.xlu0 %v1627, 8
      %v1686 = vpop.permute.xlu0 %1685
      %1687 = vrot.lane.b32.xlu0 %v1628, 8
      %v1688 = vpop.permute.xlu0 %1687
      %1689 = vrot.lane.b32.xlu0 %v1629, 8
      %v1690 = vpop.permute.xlu0 %1689
      %v1695 = vsub.f32 %v1626, %v1684
      %v1696 = vsub.f32 %v1627, %v1686
      %v1697 = vsub.f32 %v1628, %v1688
      %v1698 = vsub.f32 %v1629, %v1690
      %v1699 = vmul.f32 %v1695, 0.5
      %v1700 = vmul.f32 %v1696, 0.5
      %v1701 = vmul.f32 %v1697, 0.5
      %v1702 = vmul.f32 %v1698, 0.5
      %v1707 = vperm.slane %v1699, 0
      %v1708 = vperm.slane %v1700, 0
      %v1709 = vperm.slane %v1701, 0
      %v1710 = vperm.slane %v1702, 0
      %1711 = vrot.lane.b32.xlu0 %v1707, 64
      %v1712 = vpop.permute.xlu0 %1711
      %1713 = vrot.lane.b32.xlu0 %v1708, 64
      %v1714 = vpop.permute.xlu0 %1713
      %1715 = vrot.lane.b32.xlu0 %v1709, 64
      %v1716 = vpop.permute.xlu0 %1715
      %1717 = vrot.lane.b32.xlu0 %v1710, 64
      %v1718 = vpop.permute.xlu0 %1717
      %1723 = vst.msk [vmem:[%s333] sm:$0x1] %vm1678, %v1712
      %1724 = vst.msk [vmem:[%s333 + $0x1] sm:$0x1] %vm1678, %v1714
      %1725 = vst.msk [vmem:[%s333 + $0x2] sm:$0x1] %vm1678, %v1716
      %1726 = vst.msk [vmem:[%s333 + $0x3] sm:$0x1] %vm1678, %v1718
      %1731 = vrot.lane.b32.xlu0 %v1630, 120
      %v1732 = vpop.permute.xlu0 %1731
      %1733 = vrot.lane.b32.xlu0 %v1631, 120
      %v1734 = vpop.permute.xlu0 %1733
      %1735 = vrot.lane.b32.xlu0 %v1632, 120
      %v1736 = vpop.permute.xlu0 %1735
      %1737 = vrot.lane.b32.xlu0 %v1633, 120
      %v1738 = vpop.permute.xlu0 %1737
      %v1743 = vadd.f32 %v1630, %v1732
      %v1744 = vadd.f32 %v1631, %v1734
      %v1745 = vadd.f32 %v1632, %v1736
      %v1746 = vadd.f32 %v1633, %v1738
      %v1747 = vmul.f32 %v1743, 0.5
      %v1748 = vmul.f32 %v1744, 0.5
      %v1749 = vmul.f32 %v1745, 0.5
      %v1750 = vmul.f32 %v1746, 0.5
      %v1755 = vperm.slane %v1747, 0
      %v1756 = vperm.slane %v1748, 0
      %v1757 = vperm.slane %v1749, 0
      %v1758 = vperm.slane %v1750, 0
      %1759 = vrot.lane.b32.xlu0 %v1755, 72
      %v1760 = vpop.permute.xlu0 %1759
      %1761 = vrot.lane.b32.xlu0 %v1756, 72
      %v1762 = vpop.permute.xlu0 %1761
      %1763 = vrot.lane.b32.xlu0 %v1757, 72
      %v1764 = vpop.permute.xlu0 %1763
      %1765 = vrot.lane.b32.xlu0 %v1758, 72
      %v1766 = vpop.permute.xlu0 %1765
      %1771 = vst.msk [vmem:[%s362] sm:$0x1] %vm1678, %v1760
      %1772 = vst.msk [vmem:[%s362 + $0x1] sm:$0x1] %vm1678, %v1762
      %1773 = vst.msk [vmem:[%s362 + $0x2] sm:$0x1] %vm1678, %v1764
      %1774 = vst.msk [vmem:[%s362 + $0x3] sm:$0x1] %vm1678, %v1766
      %1775 = vrot.lane.b32.xlu0 %v1630, 8
      %v1776 = vpop.permute.xlu0 %1775
      %1777 = vrot.lane.b32.xlu0 %v1631, 8
      %v1778 = vpop.permute.xlu0 %1777
      %1779 = vrot.lane.b32.xlu0 %v1632, 8
      %v1780 = vpop.permute.xlu0 %1779
      %1781 = vrot.lane.b32.xlu0 %v1633, 8
      %v1782 = vpop.permute.xlu0 %1781
      %v1787 = vsub.f32 %v1630, %v1776
      %v1788 = vsub.f32 %v1631, %v1778
      %v1789 = vsub.f32 %v1632, %v1780
      %v1790 = vsub.f32 %v1633, %v1782
      %v1791 = vmul.f32 %v1787, 0.5
      %v1792 = vmul.f32 %v1788, 0.5
      %v1793 = vmul.f32 %v1789, 0.5
      %v1794 = vmul.f32 %v1790, 0.5
      %v1799 = vperm.slane %v1791, 0
      %v1800 = vperm.slane %v1792, 0
      %v1801 = vperm.slane %v1793, 0
      %v1802 = vperm.slane %v1794, 0
      %1803 = vrot.lane.b32.xlu0 %v1799, 64
      %v1804 = vpop.permute.xlu0 %1803
      %1805 = vrot.lane.b32.xlu0 %v1800, 64
      %v1806 = vpop.permute.xlu0 %1805
      %1807 = vrot.lane.b32.xlu0 %v1801, 64
      %v1808 = vpop.permute.xlu0 %1807
      %1809 = vrot.lane.b32.xlu0 %v1802, 64
      %v1810 = vpop.permute.xlu0 %1809
      %1815 = vst.msk [vmem:[%s407] sm:$0x1] %vm1678, %v1804
      %1816 = vst.msk [vmem:[%s407 + $0x1] sm:$0x1] %vm1678, %v1806
      %1817 = vst.msk [vmem:[%s407 + $0x2] sm:$0x1] %vm1678, %v1808
      %1818 = vst.msk [vmem:[%s407 + $0x3] sm:$0x1] %vm1678, %v1810
      %s1819 = smul.u32 4, %s19
      %p1820 = scmp.lt.s32.totalorder %s18, 1
      %s1821 = scalar_select %p1820, %s18, 1
      %p1822 = scmp.lt.s32.totalorder %s1819, 3
      %s1823 = scalar_select %p1822, %s1819, 3
      %p1824 = scmp.lt.s32.totalorder %s20, 0
      %s1825 = scalar_select %p1824, %s20, 0
      %s1826 = sadd.s32 %s1825, %s1823
      %s1827 = smul.addr %s1821, 16
      %s1828 = sadd.s32 %s1826, %s1827
      %s1829 = scalar_lea.vmem %s2, %s1828
      // Predicated region
      $region29: #{parity_fn.1} parent=27 // pred_check
        %p1830 = pneg %p114
      $region30: #{parity_fn.1} parent=27 // pred_check_branch
        %1832 = sbr.rel (%p1830) target = $region32
      $region31: #{parity_fn.1} parent=27 // pred_region
        %s1833 = smul.u32 4, %s19
      $region32: #{parity_fn.1} parent=27 // pred_fallthru
        _
    $region28: #{parity_fn.1} parent=5 // pred_fallthru
      _
    %p1834 = scmp.le.s32.totalorder 2, %s8
    // Predicated region
    $region33: #{parity_fn.1} parent=5 // pred_check
      %p1835 = pneg %p1834
    $region34: #{parity_fn.1} parent=5 // pred_check_branch
      %1837 = sbr.rel (%p1835) target = $region36
    $region35: #{parity_fn.1} parent=5 // pred_region
      %s1838 = ssub.s32 %s8, 2
      // Predicated region
      $region37: #{parity_fn.1} parent=35 // pred_check
        %p1839 = pneg %p120
      $region38: #{parity_fn.1} parent=35 // pred_check_branch
        %1841 = sbr.rel (%p1839) target = $region40
      $region39: #{parity_fn.1} parent=35 // pred_region
        %s1842 = smul.u32 4, %s22
        %p1843 = scmp.lt.s32.totalorder %s21, 1
        %s1844 = scalar_select %p1843, %s21, 1
        %p1845 = scmp.lt.s32.totalorder %s1842, 3
        %s1846 = scalar_select %p1845, %s1842, 3
        %p1847 = scmp.lt.s32.totalorder %s23, 0
        %s1848 = scalar_select %p1847, %s23, 0
        %s1849 = sadd.s32 %s1848, %s1846
        %s1850 = smul.addr %s1844, 16
        %s1851 = sadd.s32 %s1849, %s1850
        %s1852 = scalar_lea.vmem %s2, %s1851
      $region40: #{parity_fn.1} parent=35 // pred_fallthru
        _
    $region36: #{parity_fn.1} parent=5 // pred_fallthru
      _
  $region6: #{parity_fn.1} parent=0 // loop_footer
    %s12 = sadd.s32 1, %s8
  $region7: #{parity_fn.1} parent=0 // loop_footer_branch
    %7 = sbr.rel target = $region3
  $region8: #{parity_fn.1} parent=0 // loop_exit
    _

</llo_original>
